<compile_context>
chip_gen: v7x
topology: tpu7x:2x2x1
jax: 0.10.0
libtpu: 0.0.40
codegen_flags: <defaults>
</compile_context>

<pallas_src>
import jax
import jax.numpy as jnp
from jax.experimental import pallas as pl
from jax.experimental.pallas import tpu as pltpu


def _spatial_attention_kernel(x_ref, w1_ref, w2_ref, w3_ref, bs_ref, vs_ref,
                              out_ref):
    x = x_ref[...]                                        # (Bb, N, F, T)
    Bb, N, F, T = x.shape

    # lhs = (x @ W_1) @ W_2  -> (Bb, N, T)
    # contraction over T done on the VPU (exact f32), projection as ONE
    # (Bb*N, F) @ (F, T) matmul with the batch folded into the row dim.
    z = jnp.sum(x * w1_ref[...], axis=3)                  # (Bb, N, F)
    lhs = jnp.dot(z.reshape(Bb * N, F), w2_ref[...],
                  preferred_element_type=jnp.float32).reshape(Bb, N, T)

    # rhs = x.permute(0,3,1,2) @ W_3, kept transposed as (Bb, N, T)
    rhs_t = jnp.sum(x * w3_ref[...], axis=2)              # (Bb, N, T)

    # product[b] = lhs[b] @ rhs[b]  ==  lhs[b] @ rhs_t[b].T   -> (Bb, N, N)
    product = jnp.einsum('bit,bjt->bij', lhs, rhs_t,
                         preferred_element_type=jnp.float32)

    g = jax.nn.sigmoid(product + bs_ref[...])             # (Bb, N, N), f32

    # S[b] = V_s @ g[b]   (batched matmul, V_s shared across the block)
    vsb = jnp.broadcast_to(vs_ref[...], (Bb, N, N))
    S = jnp.einsum('bim,bmk->bik', vsb, g,
                   preferred_element_type=jnp.float32)    # (Bb, N, N)

    # softmax over dim 1 (torch dim=1), all in f32 on the VPU/EUP
    S = S - jnp.max(S, axis=1, keepdims=True)
    e = jnp.exp(S)
    out_ref[...] = e / jnp.sum(e, axis=1, keepdims=True)  # single bulk store


def _pick_block_b(B):
    """Largest divisor of B (<= 8) that still leaves >= 2 grid steps.

    Batching amortizes the ~0.35us per-grid-step overhead; keeping >= 2 steps
    lets both v7x TensorCores take work and keeps the pipeline busy.
    """
    divisors = [d for d in range(1, min(B, 8) + 1) if B % d == 0]
    for d in sorted(divisors, reverse=True):
        if B // d >= 2:
            return d
    return divisors[-1]


def spatial_attention_forward(x, p):
    B, N, F, T = x.shape
    Bb = _pick_block_b(B)
    num_blocks = B // Bb

    # Broadcast-friendly 2-D parameter views (pure-JAX glue, free).
    w1 = p['W_1'].reshape(1, T).astype(jnp.float32)
    w2 = p['W_2'].astype(jnp.float32)
    w3 = p['W_3'].reshape(F, 1).astype(jnp.float32)
    bs = p['b_s'].reshape(N, N).astype(jnp.float32)
    vs = p['V_s'].astype(jnp.float32)

    flops = int(B * (6 * N * F * T + 2 * N * N * T + 2 * N * N * N + 6 * N * N))
    transcendentals = int(B * 2 * N * N)
    bytes_accessed = int(4 * (B * N * F * T + B * N * N
                              + T + F * T + F + 2 * N * N))

    out = pl.pallas_call(
        _spatial_attention_kernel,
        out_shape=jax.ShapeDtypeStruct((B, N, N), jnp.float32),
        grid=(num_blocks,),
        in_specs=[
            pl.BlockSpec((Bb, N, F, T), lambda g: (g, 0, 0, 0)),  # x
            pl.BlockSpec((1, T), lambda g: (0, 0)),               # W_1
            pl.BlockSpec((F, T), lambda g: (0, 0)),               # W_2
            pl.BlockSpec((F, 1), lambda g: (0, 0)),               # W_3
            pl.BlockSpec((N, N), lambda g: (0, 0)),               # b_s
            pl.BlockSpec((N, N), lambda g: (0, 0)),               # V_s
        ],
        out_specs=pl.BlockSpec((Bb, N, N), lambda g: (g, 0, 0)),
        compiler_params=pltpu.CompilerParams(
            dimension_semantics=("parallel",)),
        cost_estimate=pl.CostEstimate(flops=flops,
                                      transcendentals=transcendentals,
                                      bytes_accessed=bytes_accessed),
    )(x.astype(jnp.float32), w1, w2, w3, bs, vs)
    return out


def reference_forward(x, p):
    """Pure-JAX mirror of the PyTorch forward (highest precision)."""
    hi = jax.lax.Precision.HIGHEST
    lhs = jnp.matmul(jnp.matmul(x, p['W_1'], precision=hi), p['W_2'],
                     precision=hi)                              # (B, N, T)
    rhs = jnp.matmul(jnp.transpose(x, (0, 3, 1, 2)), p['W_3'],
                     precision=hi)                              # (B, T, N)
    product = jnp.matmul(lhs, rhs, precision=hi)                # (B, N, N)
    S = jnp.matmul(p['V_s'], jax.nn.sigmoid(product + p['b_s']),
                   precision=hi)                                # (B, N, N)
    S = S - jnp.max(S, axis=1, keepdims=True)
    e = jnp.exp(S)
    return e / jnp.sum(e, axis=1, keepdims=True)


if __name__ == "__main__":
    # batch=8, vertices=16, features=4, timesteps=8
    B, N, F, T = 8, 16, 4, 8
    key = jax.random.PRNGKey(0)
    ks = jax.random.split(key, 6)
    # PyTorch module uses torch.randn weights; scaled by 0.2 here so the
    # sigmoid/softmax stay in a numerically informative regime for the test.
    s = 0.2
    params = {
        'W_1': s * jax.random.normal(ks[0], (T,), jnp.float32),
        'W_2': s * jax.random.normal(ks[1], (F, T), jnp.float32),
        'W_3': s * jax.random.normal(ks[2], (F,), jnp.float32),
        'b_s': s * jax.random.normal(ks[3], (1, N, N), jnp.float32),
        'V_s': s * jax.random.normal(ks[4], (N, N), jnp.float32),
    }
    x = jax.random.normal(ks[5], (B, N, F, T), jnp.float32)

    out = jax.block_until_ready(spatial_attention_forward(x, params))
    ref = jax.block_until_ready(reference_forward(x, params))
    assert out.shape == (B, N, N), out.shape
    err = float(jnp.max(jnp.abs(out - ref)))
    if err > 5e-3:
        raise AssertionError(f"kernel mismatch vs reference: max abs err = {err}")
    print("KERNEL_OK")
</pallas_src>

<mosaic_0001>
module attributes {stable_mosaic.version = 11 : i64} {
  func.func @_spatial_attention_kernel(%arg0: i32, %arg1: memref<4x16x4x8xf32, #tpu.memory_space<vmem>>, %arg2: memref<1x8xf32, #tpu.memory_space<vmem>>, %arg3: memref<4x8xf32, #tpu.memory_space<vmem>>, %arg4: memref<4x1xf32, #tpu.memory_space<vmem>>, %arg5: memref<16x16xf32, #tpu.memory_space<vmem>>, %arg6: memref<16x16xf32, #tpu.memory_space<vmem>>, %arg7: memref<4x16x16xf32, #tpu.memory_space<vmem>>) attributes {dimension_semantics = [#tpu.dimension_semantics<parallel>], iteration_bounds = array<i64: 2>, scalar_prefetch = 0 : i64, scratch_operands = 0 : i64, tpu.core_type = #tpu.core_type<tc>, window_params = [{transform_indices = @transform_0, window_bounds = array<i64: 4, 16, 4, 8>}, {pipeline_mode = #tpu.pipeline_mode<synchronous>, transform_indices = @transform_1, window_bounds = array<i64: 1, 8>}, {pipeline_mode = #tpu.pipeline_mode<synchronous>, transform_indices = @transform_2, window_bounds = array<i64: 4, 8>}, {pipeline_mode = #tpu.pipeline_mode<synchronous>, transform_indices = @transform_3, window_bounds = array<i64: 4, 1>}, {pipeline_mode = #tpu.pipeline_mode<synchronous>, transform_indices = @transform_4, window_bounds = array<i64: 16, 16>}, {pipeline_mode = #tpu.pipeline_mode<synchronous>, transform_indices = @transform_5, window_bounds = array<i64: 16, 16>}, {transform_indices = @transform_6, window_bounds = array<i64: 4, 16, 16>}]} {
    %c0 = arith.constant 0 : index
    %c0_0 = arith.constant 0 : index
    %c0_1 = arith.constant 0 : index
    %c0_2 = arith.constant 0 : index
    %0 = vector.load %arg1[%c0, %c0_0, %c0_1, %c0_2] : memref<4x16x4x8xf32, #tpu.memory_space<vmem>>, vector<4x16x4x8xf32>
    %c0_3 = arith.constant 0 : index
    %c0_4 = arith.constant 0 : index
    %1 = vector.load %arg2[%c0_3, %c0_4] : memref<1x8xf32, #tpu.memory_space<vmem>>, vector<1x8xf32>
    %2 = vector.shape_cast %1 : vector<1x8xf32> to vector<1x1x1x8xf32>
    %3 = vector.broadcast %2 : vector<1x1x1x8xf32> to vector<4x16x4x8xf32>
    %4 = arith.mulf %0, %3 : vector<4x16x4x8xf32>
    %cst = arith.constant dense<0.000000e+00> : vector<4x16x4xf32>
    %5 = vector.multi_reduction <add>, %4, %cst [3] : vector<4x16x4x8xf32> to vector<4x16x4xf32>
    %6 = vector.shape_cast %5 : vector<4x16x4xf32> to vector<64x4xf32>
    %c0_5 = arith.constant 0 : index
    %c0_6 = arith.constant 0 : index
    %7 = vector.load %arg3[%c0_5, %c0_6] : memref<4x8xf32, #tpu.memory_space<vmem>>, vector<4x8xf32>
    %cst_7 = arith.constant dense<0.000000e+00> : vector<64x8xf32>
    %8 = tpu.matmul %6, %7, %cst_7 {dimension_numbers = #tpu.dot_dimension_numbers<[1], [0], [0], [1], [0, 0, 1, 1], [], []>} : vector<64x4xf32>, vector<4x8xf32>, vector<64x8xf32> -> vector<64x8xf32>
    %9 = vector.shape_cast %8 : vector<64x8xf32> to vector<4x16x8xf32>
    %c0_8 = arith.constant 0 : index
    %c0_9 = arith.constant 0 : index
    %10 = vector.load %arg4[%c0_8, %c0_9] : memref<4x1xf32, #tpu.memory_space<vmem>>, vector<4x1xf32>
    %11 = vector.shape_cast %10 : vector<4x1xf32> to vector<1x1x4x1xf32>
    %12 = vector.broadcast %11 : vector<1x1x4x1xf32> to vector<4x16x4x8xf32>
    %13 = arith.mulf %0, %12 : vector<4x16x4x8xf32>
    %cst_10 = arith.constant dense<0.000000e+00> : vector<4x16x8xf32>
    %14 = vector.multi_reduction <add>, %13, %cst_10 [2] : vector<4x16x4x8xf32> to vector<4x16x8xf32>
    "tpu.trace_start"() <{level = 10 : i32, message = "bit,bjt->bij"}> : () -> ()
    %cst_11 = arith.constant dense<0.000000e+00> : vector<4x16x16xf32>
    %15 = tpu.matmul %9, %14, %cst_11 {dimension_numbers = #tpu.dot_dimension_numbers<[2], [2], [1], [1], [0, 0, 0, 1, 1, 1], [0], [0]>} : vector<4x16x8xf32>, vector<4x16x8xf32>, vector<4x16x16xf32> -> vector<4x16x16xf32>
    "tpu.trace_stop"() : () -> ()
    %c0_12 = arith.constant 0 : index
    %c0_13 = arith.constant 0 : index
    %16 = vector.load %arg5[%c0_12, %c0_13] : memref<16x16xf32, #tpu.memory_space<vmem>>, vector<16x16xf32>
    %17 = vector.shape_cast %16 : vector<16x16xf32> to vector<1x16x16xf32>
    %18 = vector.broadcast %17 : vector<1x16x16xf32> to vector<4x16x16xf32>
    %19 = arith.addf %15, %18 : vector<4x16x16xf32>
    %20 = arith.negf %19 : vector<4x16x16xf32>
    %21 = math.exp %20 : vector<4x16x16xf32>
    %cst_14 = arith.constant 1.000000e+00 : f32
    %22 = vector.broadcast %cst_14 : f32 to vector<4x16x16xf32>
    %23 = arith.addf %22, %21 : vector<4x16x16xf32>
    %24 = arith.divf %22, %23 : vector<4x16x16xf32>
    %c0_15 = arith.constant 0 : index
    %c0_16 = arith.constant 0 : index
    %25 = vector.load %arg6[%c0_15, %c0_16] : memref<16x16xf32, #tpu.memory_space<vmem>>, vector<16x16xf32>
    %26 = vector.shape_cast %25 : vector<16x16xf32> to vector<1x16x16xf32>
    %27 = vector.broadcast %26 : vector<1x16x16xf32> to vector<4x16x16xf32>
    "tpu.trace_start"() <{level = 10 : i32, message = "bim,bmk->bik"}> : () -> ()
    %cst_17 = arith.constant dense<0.000000e+00> : vector<4x16x16xf32>
    %28 = tpu.matmul %27, %24, %cst_17 {dimension_numbers = #tpu.dot_dimension_numbers<[2], [1], [1], [2], [0, 0, 0, 1, 1, 2], [0], [0]>} : vector<4x16x16xf32>, vector<4x16x16xf32>, vector<4x16x16xf32> -> vector<4x16x16xf32>
    "tpu.trace_stop"() : () -> ()
    %cst_18 = arith.constant dense<0xFF800000> : vector<4x16xf32>
    %29 = vector.multi_reduction <maximumf>, %28, %cst_18 [1] : vector<4x16x16xf32> to vector<4x16xf32>
    %30 = vector.shape_cast %29 : vector<4x16xf32> to vector<4x1x16xf32>
    %31 = vector.broadcast %30 : vector<4x1x16xf32> to vector<4x16x16xf32>
    %32 = arith.subf %28, %31 : vector<4x16x16xf32>
    %33 = math.exp %32 : vector<4x16x16xf32>
    %cst_19 = arith.constant dense<0.000000e+00> : vector<4x16xf32>
    %34 = vector.multi_reduction <add>, %33, %cst_19 [1] : vector<4x16x16xf32> to vector<4x16xf32>
    %35 = vector.shape_cast %34 : vector<4x16xf32> to vector<4x1x16xf32>
    %36 = vector.broadcast %35 : vector<4x1x16xf32> to vector<4x16x16xf32>
    %37 = arith.divf %33, %36 : vector<4x16x16xf32>
    %c0_20 = arith.constant 0 : index
    %c0_21 = arith.constant 0 : index
    %c0_22 = arith.constant 0 : index
    %38 = vector.load %arg7[%c0_20, %c0_21, %c0_22] : memref<4x16x16xf32, #tpu.memory_space<vmem>>, vector<4x16x16xf32>
    tpu.vector_store %arg7[%c0_20, %c0_21, %c0_22], %37 {strides = array<i32>} : memref<4x16x16xf32, #tpu.memory_space<vmem>>, vector<4x16x16xf32>,
    return
  }
  func.func @transform_0(%arg0: i32) -> (i32, i32, i32, i32) {
    %c0_i32 = arith.constant 0 : i32
    %c0_i32_0 = arith.constant 0 : i32
    %c0_i32_1 = arith.constant 0 : i32
    %c0_i32_2 = arith.constant 0 : i32
    return %arg0, %c0_i32, %c0_i32_0, %c0_i32_1 : i32, i32, i32, i32
  }
  func.func @transform_1(%arg0: i32) -> (i32, i32) {
    %c0_i32 = arith.constant 0 : i32
    %c0_i32_0 = arith.constant 0 : i32
    %c0_i32_1 = arith.constant 0 : i32
    return %c0_i32, %c0_i32_0 : i32, i32
  }
  func.func @transform_2(%arg0: i32) -> (i32, i32) {
    %c0_i32 = arith.constant 0 : i32
    %c0_i32_0 = arith.constant 0 : i32
    %c0_i32_1 = arith.constant 0 : i32
    return %c0_i32, %c0_i32_0 : i32, i32
  }
  func.func @transform_3(%arg0: i32) -> (i32, i32) {
    %c0_i32 = arith.constant 0 : i32
    %c0_i32_0 = arith.constant 0 : i32
    %c0_i32_1 = arith.constant 0 : i32
    return %c0_i32, %c0_i32_0 : i32, i32
  }
  func.func @transform_4(%arg0: i32) -> (i32, i32) {
    %c0_i32 = arith.constant 0 : i32
    %c0_i32_0 = arith.constant 0 : i32
    %c0_i32_1 = arith.constant 0 : i32
    return %c0_i32, %c0_i32_0 : i32, i32
  }
  func.func @transform_5(%arg0: i32) -> (i32, i32) {
    %c0_i32 = arith.constant 0 : i32
    %c0_i32_0 = arith.constant 0 : i32
    %c0_i32_1 = arith.constant 0 : i32
    return %c0_i32, %c0_i32_0 : i32, i32
  }
  func.func @transform_6(%arg0: i32) -> (i32, i32, i32) {
    %c0_i32 = arith.constant 0 : i32
    %c0_i32_0 = arith.constant 0 : i32
    %c0_i32_1 = arith.constant 0 : i32
    return %arg0, %c0_i32, %c0_i32_0 : i32, i32, i32
  }
}

</mosaic_0001>

<llo_original>
// kernel: tpu_custom_call.1
$region0: #{tpu_custom_call.1}
  #allocation0 [shape = 'u32[]', space=smem, size = 0x4, offset = 0x4, fixed_abs, tag = 'smem constant byte address 0x4 - core index']
  #allocation1 [shape = 'u32[144,128]{1,0:T(1,128)}', space=vmem, size = 0x12000, scoped, tag = 'internal scratch']
  %s0 = inlined_call_operand.vmem [shape: f32[8,16,4,8], index: 0, kind: input, shape index: {}]
  %s1 = inlined_call_operand.vmem [shape: f32[1,8], index: 1, kind: input, shape index: {}]
  %s2 = inlined_call_operand.vmem [shape: f32[4,8], index: 2, kind: input, shape index: {}]
  %s3 = inlined_call_operand.vmem [shape: f32[4,1], index: 3, kind: input, shape index: {}]
  %s4 = inlined_call_operand.vmem [shape: f32[16,16], index: 4, kind: input, shape index: {}]
  %s5 = inlined_call_operand.vmem [shape: f32[16,16], index: 5, kind: input, shape index: {}]
  %s6 = inlined_call_operand.hbm [shape: f32[8,16,16], index: 6, kind: output, shape index: {}]
  %s7 = sld [smem:[#allocation0]]
  $region57: #{tpu_custom_call.1} parent=0
    _
  %s9 = ssub.s32 1, %s7
  %s10 = scalar_select 0, %s9, %s7
  $region1: #{tpu_custom_call.1} parent=0
    #allocation2 [shape = 'u8[65536]{0}', space=vmem, size = 0x10000, scoped, tag = 'output window, operand 0']
    #allocation3 [shape = 's32[2]{0}', space=sflag, size = 0x8, scoped, tag = 'scoped memory for tpu_custom_call.1']
    %11 = vsyncpa [#allocation3], 0
    %s12 = scalar_lea.sflag [#allocation3], 1
    %13 = vsyncpa %s12, 0
    loop: start=0, step=1, limit=4
    $region2: #{tpu_custom_call.1} parent=1 // loop_pre_header
      _
    $region3: #{tpu_custom_call.1} parent=1 // loop_header
      %s15 = sphi 0, %s19
      %p16 = scmp.ge.s32.totalorder %s15, 4
      %s25 = sphi 0, %s27
      %s28 = sphi 0, %s25
      %s29 = sphi 0, %s28
      %s45 = sphi 0, %s29
      %s49 = sphi 0, %s49
      %s51 = sphi 0, %s49
      %s52 = sphi 0, %s51
      %s66 = sphi 0, %s52
      %s70 = sphi 0, %s70
      %s72 = sphi 0, %s70
      %s73 = sphi 0, %s72
      %s87 = sphi 0, %s73
      %s91 = sphi 0, %s91
      %s93 = sphi 0, %s91
      %s94 = sphi 0, %s93
      %s108 = sphi 0, %s94
      %s112 = sphi 0, %s112
      %s114 = sphi 0, %s112
      %s115 = sphi 0, %s114
      %s129 = sphi 0, %s115
      %s133 = sphi 0, %s133
      %s135 = sphi 0, %s133
      %s136 = sphi 0, %s135
      %s150 = sphi 0, %s136
      %s156 = sphi 0, %s158
      %s159 = sphi 0, %s156
      %s160 = sphi 0, %s159
      %s176 = sphi 0, %s160
    $region4: #{tpu_custom_call.1} parent=1 // loop_header_branch
      %18 = sbr.rel (%p16) target = $region8
    $region5: #{tpu_custom_call.1} parent=1 // loop_body
      %s20 = ssub.s32 %s15, 1
      %s21 = ssub.s32 %s15, 2
      %s22 = sadd.s32 %s15, 1
      %s23 = ssub.s32 %s15, %s22
      %p24 = scmp.eq.s32.totalorder %s23, 0
      %s26 = sadd.s32 %s25, 1
      %s27 = scalar_select %p24, %s25, %s26
      %p30 = pneg %p24
      %p31 = scmp.eq.s32.totalorder %s15, 1
      %p32 = por %p30, %p31
      %p33 = scmp.ne.s32.totalorder %s25, %s28
      %p34 = scmp.eq.s32.totalorder %s15, 0
      %p35 = por %p33, %p34
      %p36 = scmp.ne.s32.totalorder %s25, %s28
      %p37 = scmp.eq.s32.totalorder %s20, 1
      %p38 = por %p36, %p37
      %p39 = scmp.ne.s32.totalorder %s28, %s29
      %p40 = scmp.eq.s32.totalorder %s20, 0
      %p41 = por %p39, %p40
      %p42 = scmp.ne.s32.totalorder %s28, %s29
      %p43 = scmp.eq.s32.totalorder %s21, 1
      %p44 = por %p42, %p43
      %p46 = scmp.ne.s32.totalorder %s29, %s45
      %p47 = scmp.eq.s32.totalorder %s21, 0
      %p48 = por %p46, %p47
      %s50 = sadd.s32 %s49, 1
      %p53 = scmp.eq.s32.totalorder %s15, 1
      %p54 = scmp.ne.s32.totalorder %s49, %s51
      %p55 = scmp.eq.s32.totalorder %s15, 0
      %p56 = por %p54, %p55
      %p57 = scmp.ne.s32.totalorder %s49, %s51
      %p58 = scmp.eq.s32.totalorder %s20, 1
      %p59 = por %p57, %p58
      %p60 = scmp.ne.s32.totalorder %s51, %s52
      %p61 = scmp.eq.s32.totalorder %s20, 0
      %p62 = por %p60, %p61
      %p63 = scmp.ne.s32.totalorder %s51, %s52
      %p64 = scmp.eq.s32.totalorder %s21, 1
      %p65 = por %p63, %p64
      %p67 = scmp.ne.s32.totalorder %s52, %s66
      %p68 = scmp.eq.s32.totalorder %s21, 0
      %p69 = por %p67, %p68
      %s71 = sadd.s32 %s70, 1
      %p74 = scmp.eq.s32.totalorder %s15, 1
      %p75 = scmp.ne.s32.totalorder %s70, %s72
      %p76 = scmp.eq.s32.totalorder %s15, 0
      %p77 = por %p75, %p76
      %p78 = scmp.ne.s32.totalorder %s70, %s72
      %p79 = scmp.eq.s32.totalorder %s20, 1
      %p80 = por %p78, %p79
      %p81 = scmp.ne.s32.totalorder %s72, %s73
      %p82 = scmp.eq.s32.totalorder %s20, 0
      %p83 = por %p81, %p82
      %p84 = scmp.ne.s32.totalorder %s72, %s73
      %p85 = scmp.eq.s32.totalorder %s21, 1
      %p86 = por %p84, %p85
      %p88 = scmp.ne.s32.totalorder %s73, %s87
      %p89 = scmp.eq.s32.totalorder %s21, 0
      %p90 = por %p88, %p89
      %s92 = sadd.s32 %s91, 1
      %p95 = scmp.eq.s32.totalorder %s15, 1
      %p96 = scmp.ne.s32.totalorder %s91, %s93
      %p97 = scmp.eq.s32.totalorder %s15, 0
      %p98 = por %p96, %p97
      %p99 = scmp.ne.s32.totalorder %s91, %s93
      %p100 = scmp.eq.s32.totalorder %s20, 1
      %p101 = por %p99, %p100
      %p102 = scmp.ne.s32.totalorder %s93, %s94
      %p103 = scmp.eq.s32.totalorder %s20, 0
      %p104 = por %p102, %p103
      %p105 = scmp.ne.s32.totalorder %s93, %s94
      %p106 = scmp.eq.s32.totalorder %s21, 1
      %p107 = por %p105, %p106
      %p109 = scmp.ne.s32.totalorder %s94, %s108
      %p110 = scmp.eq.s32.totalorder %s21, 0
      %p111 = por %p109, %p110
      %s113 = sadd.s32 %s112, 1
      %p116 = scmp.eq.s32.totalorder %s15, 1
      %p117 = scmp.ne.s32.totalorder %s112, %s114
      %p118 = scmp.eq.s32.totalorder %s15, 0
      %p119 = por %p117, %p118
      %p120 = scmp.ne.s32.totalorder %s112, %s114
      %p121 = scmp.eq.s32.totalorder %s20, 1
      %p122 = por %p120, %p121
      %p123 = scmp.ne.s32.totalorder %s114, %s115
      %p124 = scmp.eq.s32.totalorder %s20, 0
      %p125 = por %p123, %p124
      %p126 = scmp.ne.s32.totalorder %s114, %s115
      %p127 = scmp.eq.s32.totalorder %s21, 1
      %p128 = por %p126, %p127
      %p130 = scmp.ne.s32.totalorder %s115, %s129
      %p131 = scmp.eq.s32.totalorder %s21, 0
      %p132 = por %p130, %p131
      %s134 = sadd.s32 %s133, 1
      %p137 = scmp.eq.s32.totalorder %s15, 1
      %p138 = scmp.ne.s32.totalorder %s133, %s135
      %p139 = scmp.eq.s32.totalorder %s15, 0
      %p140 = por %p138, %p139
      %p141 = scmp.ne.s32.totalorder %s133, %s135
      %p142 = scmp.eq.s32.totalorder %s20, 1
      %p143 = por %p141, %p142
      %p144 = scmp.ne.s32.totalorder %s135, %s136
      %p145 = scmp.eq.s32.totalorder %s20, 0
      %p146 = por %p144, %p145
      %p147 = scmp.ne.s32.totalorder %s135, %s136
      %p148 = scmp.eq.s32.totalorder %s21, 1
      %p149 = por %p147, %p148
      %p151 = scmp.ne.s32.totalorder %s136, %s150
      %p152 = scmp.eq.s32.totalorder %s21, 0
      %p153 = por %p151, %p152
      %s154 = ssub.s32 %s15, %s22
      %p155 = scmp.eq.s32.totalorder %s154, 0
      %s157 = sadd.s32 %s156, 1
      %s158 = scalar_select %p155, %s156, %s157
      %p161 = pneg %p155
      %p162 = scmp.eq.s32.totalorder %s15, 1
      %p163 = por %p161, %p162
      %p164 = scmp.ne.s32.totalorder %s156, %s159
      %p165 = scmp.eq.s32.totalorder %s15, 0
      %p166 = por %p164, %p165
      %p167 = scmp.ne.s32.totalorder %s156, %s159
      %p168 = scmp.eq.s32.totalorder %s20, 1
      %p169 = por %p167, %p168
      %p170 = scmp.ne.s32.totalorder %s159, %s160
      %p171 = scmp.eq.s32.totalorder %s20, 0
      %p172 = por %p170, %p171
      %p173 = scmp.ne.s32.totalorder %s159, %s160
      %p174 = scmp.eq.s32.totalorder %s21, 1
      %p175 = por %p173, %p174
      %p177 = scmp.ne.s32.totalorder %s160, %s176
      %p178 = scmp.eq.s32.totalorder %s21, 0
      %p179 = por %p177, %p178
      %p180 = scmp.le.s32.totalorder 1, %s15
      %p181 = scmp.lt.s32.totalorder %s15, 3
      %p182 = pnand %p180, %p181
      %p183 = pneg %p182
      // Predicated region
      $region9: #{tpu_custom_call.1} parent=5 // pred_check
        _
      $region10: #{tpu_custom_call.1} parent=5 // pred_check_branch
        %185 = sbr.rel (%p182) target = $region12
      $region11: #{tpu_custom_call.1} parent=5 // pred_region
        %s186 = ssub.s32 %s15, 1
        // Predicated region
        $region13: #{tpu_custom_call.1} parent=11 // pred_check
          %p187 = pneg %p62
        $region14: #{tpu_custom_call.1} parent=11 // pred_check_branch
          %189 = sbr.rel (%p187) target = $region16
        $region15: #{tpu_custom_call.1} parent=11 // pred_region
          _
        $region16: #{tpu_custom_call.1} parent=11 // pred_fallthru
          _
        // Predicated region
        $region17: #{tpu_custom_call.1} parent=11 // pred_check
          %p190 = pneg %p83
        $region18: #{tpu_custom_call.1} parent=11 // pred_check_branch
          %192 = sbr.rel (%p190) target = $region20
        $region19: #{tpu_custom_call.1} parent=11 // pred_region
          _
        $region20: #{tpu_custom_call.1} parent=11 // pred_fallthru
          _
        // Predicated region
        $region21: #{tpu_custom_call.1} parent=11 // pred_check
          %p193 = pneg %p104
        $region22: #{tpu_custom_call.1} parent=11 // pred_check_branch
          %195 = sbr.rel (%p193) target = $region24
        $region23: #{tpu_custom_call.1} parent=11 // pred_region
          _
        $region24: #{tpu_custom_call.1} parent=11 // pred_fallthru
          _
        // Predicated region
        $region25: #{tpu_custom_call.1} parent=11 // pred_check
          %p196 = pneg %p125
        $region26: #{tpu_custom_call.1} parent=11 // pred_check_branch
          %198 = sbr.rel (%p196) target = $region28
        $region27: #{tpu_custom_call.1} parent=11 // pred_region
          _
        $region28: #{tpu_custom_call.1} parent=11 // pred_fallthru
          _
        // Predicated region
        $region29: #{tpu_custom_call.1} parent=11 // pred_check
          %p199 = pneg %p146
        $region30: #{tpu_custom_call.1} parent=11 // pred_check_branch
          %201 = sbr.rel (%p199) target = $region32
        $region31: #{tpu_custom_call.1} parent=11 // pred_region
          _
        $region32: #{tpu_custom_call.1} parent=11 // pred_fallthru
          _
      $region12: #{tpu_custom_call.1} parent=5 // pred_fallthru
        _
      %p202 = scmp.lt.s32.totalorder %s15, 2
      // Predicated region
      $region33: #{tpu_custom_call.1} parent=5 // pred_check
        %p203 = pneg %p202
      $region34: #{tpu_custom_call.1} parent=5 // pred_check_branch
        %205 = sbr.rel (%p203) target = $region36
      $region35: #{tpu_custom_call.1} parent=5 // pred_region
        // Predicated region
        $region37: #{tpu_custom_call.1} parent=35 // pred_check
          %p206 = pneg %p35
        $region38: #{tpu_custom_call.1} parent=35 // pred_check_branch
          %208 = sbr.rel (%p206) target = $region40
        $region39: #{tpu_custom_call.1} parent=35 // pred_region
          %s209 = smul.u32 4, %s15
          %p210 = scmp.lt.s32.totalorder %s209, 7
          %s211 = scalar_select %p210, %s209, 7
          %s212 = smul.addr %s211, 16
          %s213 = smul.addr %s212, 4
          %s214 = scalar_lea.vmem %s0, %s213
          %s215 = smul.u32 4, %s15
        $region40: #{tpu_custom_call.1} parent=35 // pred_fallthru
          _
      $region36: #{tpu_custom_call.1} parent=5 // pred_fallthru
        _
      %p216 = scmp.le.s32.totalorder 1, %s15
      %p217 = scmp.lt.s32.totalorder %s15, 3
      %p218 = pnand %p216, %p217
      %p219 = pneg %p218
      // Predicated region
      $region41: #{tpu_custom_call.1} parent=5 // pred_check
        _
      $region42: #{tpu_custom_call.1} parent=5 // pred_check_branch
        %221 = sbr.rel (%p218) target = $region44
      $region43: #{tpu_custom_call.1} parent=5 // pred_region
        %s222 = ssub.s32 %s15, 1
        %s223 = smul.u32 4, %s20
        %p224 = scmp.lt.s32.totalorder %s223, 7
        %s225 = scalar_select %p224, %s223, 7
        %s226 = smul.addr %s225, 16
        %s227 = smul.addr %s226, 4
        %s228 = scalar_lea.vmem %s0, %s227
        %p229 = pneg %p41
        %p230 = pneg %p38
        %p231 = pneg %p62
        %p232 = pneg %p59
        %p233 = pneg %p83
        %p234 = pneg %p80
        %p235 = pneg %p104
        %p236 = pneg %p101
        %p237 = pneg %p125
        %p238 = pneg %p122
        %p239 = pneg %p146
        %p240 = pneg %p143
        %p241 = pneg %p172
        %p242 = pneg %p169
        %s243 = sand.u32 %s159, 1
        %s244 = scalar_lea.sflag [#allocation3], %s243
        %s245 = sand.u32 %s159, 1
        %s246 = smul.addr %s245, 64
        %s247 = scalar_lea.vmem [#allocation2], %s246
        %s248 = smul.u32 4, %s20
        %p249 = scmp.lt.s32.totalorder %s248, 7
        %s250 = scalar_select %p249, %s248, 7
        %s251 = smul.addr %s250, 16
        %s252 = smul.addr %s251, 4
        %s253 = scalar_lea.vmem %s0, %s252
        %s254 = smul.u32 4, %s20
        %s255 = smul.u32 4, %s20
        %v256 = vld [vmem:[%s253] sm:$0xf]
        %v257 = vld [vmem:[%s253 + $0x4] sm:$0xf]
        %v258 = vld [vmem:[%s253 + $0x8] sm:$0xf]
        %v259 = vld [vmem:[%s253 + $0xc] sm:$0xf]
        %v260 = vld [vmem:[%s253 + $0x10] sm:$0xf]
        %v261 = vld [vmem:[%s253 + $0x14] sm:$0xf]
        %v262 = vld [vmem:[%s253 + $0x18] sm:$0xf]
        %v263 = vld [vmem:[%s253 + $0x1c] sm:$0xf]
        %v264 = vld [vmem:[%s253 + $0x20] sm:$0xf]
        %v265 = vld [vmem:[%s253 + $0x24] sm:$0xf]
        %v266 = vld [vmem:[%s253 + $0x28] sm:$0xf]
        %v267 = vld [vmem:[%s253 + $0x2c] sm:$0xf]
        %v268 = vld [vmem:[%s253 + $0x30] sm:$0xf]
        %v269 = vld [vmem:[%s253 + $0x34] sm:$0xf]
        %v270 = vld [vmem:[%s253 + $0x38] sm:$0xf]
        %v271 = vld [vmem:[%s253 + $0x3c] sm:$0xf]
        %v272 = vld [vmem:[%s253 + $0x40] sm:$0xf]
        %v273 = vld [vmem:[%s253 + $0x44] sm:$0xf]
        %v274 = vld [vmem:[%s253 + $0x48] sm:$0xf]
        %v275 = vld [vmem:[%s253 + $0x4c] sm:$0xf]
        %v276 = vld [vmem:[%s253 + $0x50] sm:$0xf]
        %v277 = vld [vmem:[%s253 + $0x54] sm:$0xf]
        %v278 = vld [vmem:[%s253 + $0x58] sm:$0xf]
        %v279 = vld [vmem:[%s253 + $0x5c] sm:$0xf]
        %v280 = vld [vmem:[%s253 + $0x60] sm:$0xf]
        %v281 = vld [vmem:[%s253 + $0x64] sm:$0xf]
        %v282 = vld [vmem:[%s253 + $0x68] sm:$0xf]
        %v283 = vld [vmem:[%s253 + $0x6c] sm:$0xf]
        %v284 = vld [vmem:[%s253 + $0x70] sm:$0xf]
        %v285 = vld [vmem:[%s253 + $0x74] sm:$0xf]
        %v286 = vld [vmem:[%s253 + $0x78] sm:$0xf]
        %v287 = vld [vmem:[%s253 + $0x7c] sm:$0xf]
        %v288 = vld [vmem:[%s253 + $0x80] sm:$0xf]
        %v289 = vld [vmem:[%s253 + $0x84] sm:$0xf]
        %v290 = vld [vmem:[%s253 + $0x88] sm:$0xf]
        %v291 = vld [vmem:[%s253 + $0x8c] sm:$0xf]
        %v292 = vld [vmem:[%s253 + $0x90] sm:$0xf]
        %v293 = vld [vmem:[%s253 + $0x94] sm:$0xf]
        %v294 = vld [vmem:[%s253 + $0x98] sm:$0xf]
        %v295 = vld [vmem:[%s253 + $0x9c] sm:$0xf]
        %v296 = vld [vmem:[%s253 + $0xa0] sm:$0xf]
        %v297 = vld [vmem:[%s253 + $0xa4] sm:$0xf]
        %v298 = vld [vmem:[%s253 + $0xa8] sm:$0xf]
        %v299 = vld [vmem:[%s253 + $0xac] sm:$0xf]
        %v300 = vld [vmem:[%s253 + $0xb0] sm:$0xf]
        %v301 = vld [vmem:[%s253 + $0xb4] sm:$0xf]
        %v302 = vld [vmem:[%s253 + $0xb8] sm:$0xf]
        %v303 = vld [vmem:[%s253 + $0xbc] sm:$0xf]
        %v304 = vld [vmem:[%s253 + $0xc0] sm:$0xf]
        %v305 = vld [vmem:[%s253 + $0xc4] sm:$0xf]
        %v306 = vld [vmem:[%s253 + $0xc8] sm:$0xf]
        %v307 = vld [vmem:[%s253 + $0xcc] sm:$0xf]
        %v308 = vld [vmem:[%s253 + $0xd0] sm:$0xf]
        %v309 = vld [vmem:[%s253 + $0xd4] sm:$0xf]
        %v310 = vld [vmem:[%s253 + $0xd8] sm:$0xf]
        %v311 = vld [vmem:[%s253 + $0xdc] sm:$0xf]
        %v312 = vld [vmem:[%s253 + $0xe0] sm:$0xf]
        %v313 = vld [vmem:[%s253 + $0xe4] sm:$0xf]
        %v314 = vld [vmem:[%s253 + $0xe8] sm:$0xf]
        %v315 = vld [vmem:[%s253 + $0xec] sm:$0xf]
        %v316 = vld [vmem:[%s253 + $0xf0] sm:$0xf]
        %v317 = vld [vmem:[%s253 + $0xf4] sm:$0xf]
        %v318 = vld [vmem:[%s253 + $0xf8] sm:$0xf]
        %v319 = vld [vmem:[%s253 + $0xfc] sm:$0xf]
        %v320 = vld [vmem:[%s1] sm:$0x1]
        %v322 = vlaneseq
        %v323 = vshrl.u32 %v322, 7
        %v324 = vsub.s32 0, %v323
        %v325 = vrot.slane %v320, %v324
        %v327 = vmul.f32 %v256, %v325
        %v328 = vmul.f32 %v257, %v325
        %v329 = vmul.f32 %v258, %v325
        %v330 = vmul.f32 %v259, %v325
        %v331 = vmul.f32 %v260, %v325
        %v332 = vmul.f32 %v261, %v325
        %v333 = vmul.f32 %v262, %v325
        %v334 = vmul.f32 %v263, %v325
        %v335 = vmul.f32 %v264, %v325
        %v336 = vmul.f32 %v265, %v325
        %v337 = vmul.f32 %v266, %v325
        %v338 = vmul.f32 %v267, %v325
        %v339 = vmul.f32 %v268, %v325
        %v340 = vmul.f32 %v269, %v325
        %v341 = vmul.f32 %v270, %v325
        %v342 = vmul.f32 %v271, %v325
        %v343 = vmul.f32 %v272, %v325
        %v344 = vmul.f32 %v273, %v325
        %v345 = vmul.f32 %v274, %v325
        %v346 = vmul.f32 %v275, %v325
        %v347 = vmul.f32 %v276, %v325
        %v348 = vmul.f32 %v277, %v325
        %v349 = vmul.f32 %v278, %v325
        %v350 = vmul.f32 %v279, %v325
        %v351 = vmul.f32 %v280, %v325
        %v352 = vmul.f32 %v281, %v325
        %v353 = vmul.f32 %v282, %v325
        %v354 = vmul.f32 %v283, %v325
        %v355 = vmul.f32 %v284, %v325
        %v356 = vmul.f32 %v285, %v325
        %v357 = vmul.f32 %v286, %v325
        %v358 = vmul.f32 %v287, %v325
        %v359 = vmul.f32 %v288, %v325
        %v360 = vmul.f32 %v289, %v325
        %v361 = vmul.f32 %v290, %v325
        %v362 = vmul.f32 %v291, %v325
        %v363 = vmul.f32 %v292, %v325
        %v364 = vmul.f32 %v293, %v325
        %v365 = vmul.f32 %v294, %v325
        %v366 = vmul.f32 %v295, %v325
        %v367 = vmul.f32 %v296, %v325
        %v368 = vmul.f32 %v297, %v325
        %v369 = vmul.f32 %v298, %v325
        %v370 = vmul.f32 %v299, %v325
        %v371 = vmul.f32 %v300, %v325
        %v372 = vmul.f32 %v301, %v325
        %v373 = vmul.f32 %v302, %v325
        %v374 = vmul.f32 %v303, %v325
        %v375 = vmul.f32 %v304, %v325
        %v376 = vmul.f32 %v305, %v325
        %v377 = vmul.f32 %v306, %v325
        %v378 = vmul.f32 %v307, %v325
        %v379 = vmul.f32 %v308, %v325
        %v380 = vmul.f32 %v309, %v325
        %v381 = vmul.f32 %v310, %v325
        %v382 = vmul.f32 %v311, %v325
        %v383 = vmul.f32 %v312, %v325
        %v384 = vmul.f32 %v313, %v325
        %v385 = vmul.f32 %v314, %v325
        %v386 = vmul.f32 %v315, %v325
        %v387 = vmul.f32 %v316, %v325
        %v388 = vmul.f32 %v317, %v325
        %v389 = vmul.f32 %v318, %v325
        %v390 = vmul.f32 %v319, %v325
        %vm391 = vcmask 60416
        %v392 = vsel %vm391, %v327, 0.0
        %393 = vadd.xlane.f32.xlu0 %v392
        %v394 = vpop.xlane.xlu0 %393
        %v395 = vsel %vm391, %v328, 0.0
        %396 = vadd.xlane.f32.xlu0 %v395
        %v397 = vpop.xlane.xlu0 %396
        %v398 = vsel %vm391, %v329, 0.0
        %399 = vadd.xlane.f32.xlu0 %v398
        %v400 = vpop.xlane.xlu0 %399
        %v401 = vsel %vm391, %v330, 0.0
        %402 = vadd.xlane.f32.xlu0 %v401
        %v403 = vpop.xlane.xlu0 %402
        %v404 = vsel %vm391, %v331, 0.0
        %405 = vadd.xlane.f32.xlu0 %v404
        %v406 = vpop.xlane.xlu0 %405
        %v407 = vsel %vm391, %v332, 0.0
        %408 = vadd.xlane.f32.xlu0 %v407
        %v409 = vpop.xlane.xlu0 %408
        %v410 = vsel %vm391, %v333, 0.0
        %411 = vadd.xlane.f32.xlu0 %v410
        %v412 = vpop.xlane.xlu0 %411
        %v413 = vsel %vm391, %v334, 0.0
        %414 = vadd.xlane.f32.xlu0 %v413
        %v415 = vpop.xlane.xlu0 %414
        %v416 = vsel %vm391, %v335, 0.0
        %417 = vadd.xlane.f32.xlu0 %v416
        %v418 = vpop.xlane.xlu0 %417
        %v419 = vsel %vm391, %v336, 0.0
        %420 = vadd.xlane.f32.xlu0 %v419
        %v421 = vpop.xlane.xlu0 %420
        %v422 = vsel %vm391, %v337, 0.0
        %423 = vadd.xlane.f32.xlu0 %v422
        %v424 = vpop.xlane.xlu0 %423
        %v425 = vsel %vm391, %v338, 0.0
        %426 = vadd.xlane.f32.xlu0 %v425
        %v427 = vpop.xlane.xlu0 %426
        %v428 = vsel %vm391, %v339, 0.0
        %429 = vadd.xlane.f32.xlu0 %v428
        %v430 = vpop.xlane.xlu0 %429
        %v431 = vsel %vm391, %v340, 0.0
        %432 = vadd.xlane.f32.xlu0 %v431
        %v433 = vpop.xlane.xlu0 %432
        %v434 = vsel %vm391, %v341, 0.0
        %435 = vadd.xlane.f32.xlu0 %v434
        %v436 = vpop.xlane.xlu0 %435
        %v437 = vsel %vm391, %v342, 0.0
        %438 = vadd.xlane.f32.xlu0 %v437
        %v439 = vpop.xlane.xlu0 %438
        %v440 = vsel %vm391, %v343, 0.0
        %441 = vadd.xlane.f32.xlu0 %v440
        %v442 = vpop.xlane.xlu0 %441
        %v443 = vsel %vm391, %v344, 0.0
        %444 = vadd.xlane.f32.xlu0 %v443
        %v445 = vpop.xlane.xlu0 %444
        %v446 = vsel %vm391, %v345, 0.0
        %447 = vadd.xlane.f32.xlu0 %v446
        %v448 = vpop.xlane.xlu0 %447
        %v449 = vsel %vm391, %v346, 0.0
        %450 = vadd.xlane.f32.xlu0 %v449
        %v451 = vpop.xlane.xlu0 %450
        %v452 = vsel %vm391, %v347, 0.0
        %453 = vadd.xlane.f32.xlu0 %v452
        %v454 = vpop.xlane.xlu0 %453
        %v455 = vsel %vm391, %v348, 0.0
        %456 = vadd.xlane.f32.xlu0 %v455
        %v457 = vpop.xlane.xlu0 %456
        %v458 = vsel %vm391, %v349, 0.0
        %459 = vadd.xlane.f32.xlu0 %v458
        %v460 = vpop.xlane.xlu0 %459
        %v461 = vsel %vm391, %v350, 0.0
        %462 = vadd.xlane.f32.xlu0 %v461
        %v463 = vpop.xlane.xlu0 %462
        %v464 = vsel %vm391, %v351, 0.0
        %465 = vadd.xlane.f32.xlu0 %v464
        %v466 = vpop.xlane.xlu0 %465
        %v467 = vsel %vm391, %v352, 0.0
        %468 = vadd.xlane.f32.xlu0 %v467
        %v469 = vpop.xlane.xlu0 %468
        %v470 = vsel %vm391, %v353, 0.0
        %471 = vadd.xlane.f32.xlu0 %v470
        %v472 = vpop.xlane.xlu0 %471
        %v473 = vsel %vm391, %v354, 0.0
        %474 = vadd.xlane.f32.xlu0 %v473
        %v475 = vpop.xlane.xlu0 %474
        %v476 = vsel %vm391, %v355, 0.0
        %477 = vadd.xlane.f32.xlu0 %v476
        %v478 = vpop.xlane.xlu0 %477
        %v479 = vsel %vm391, %v356, 0.0
        %480 = vadd.xlane.f32.xlu0 %v479
        %v481 = vpop.xlane.xlu0 %480
        %v482 = vsel %vm391, %v357, 0.0
        %483 = vadd.xlane.f32.xlu0 %v482
        %v484 = vpop.xlane.xlu0 %483
        %v485 = vsel %vm391, %v358, 0.0
        %486 = vadd.xlane.f32.xlu0 %v485
        %v487 = vpop.xlane.xlu0 %486
        %v488 = vsel %vm391, %v359, 0.0
        %489 = vadd.xlane.f32.xlu0 %v488
        %v490 = vpop.xlane.xlu0 %489
        %v491 = vsel %vm391, %v360, 0.0
        %492 = vadd.xlane.f32.xlu0 %v491
        %v493 = vpop.xlane.xlu0 %492
        %v494 = vsel %vm391, %v361, 0.0
        %495 = vadd.xlane.f32.xlu0 %v494
        %v496 = vpop.xlane.xlu0 %495
        %v497 = vsel %vm391, %v362, 0.0
        %498 = vadd.xlane.f32.xlu0 %v497
        %v499 = vpop.xlane.xlu0 %498
        %v500 = vsel %vm391, %v363, 0.0
        %501 = vadd.xlane.f32.xlu0 %v500
        %v502 = vpop.xlane.xlu0 %501
        %v503 = vsel %vm391, %v364, 0.0
        %504 = vadd.xlane.f32.xlu0 %v503
        %v505 = vpop.xlane.xlu0 %504
        %v506 = vsel %vm391, %v365, 0.0
        %507 = vadd.xlane.f32.xlu0 %v506
        %v508 = vpop.xlane.xlu0 %507
        %v509 = vsel %vm391, %v366, 0.0
        %510 = vadd.xlane.f32.xlu0 %v509
        %v511 = vpop.xlane.xlu0 %510
        %v512 = vsel %vm391, %v367, 0.0
        %513 = vadd.xlane.f32.xlu0 %v512
        %v514 = vpop.xlane.xlu0 %513
        %v515 = vsel %vm391, %v368, 0.0
        %516 = vadd.xlane.f32.xlu0 %v515
        %v517 = vpop.xlane.xlu0 %516
        %v518 = vsel %vm391, %v369, 0.0
        %519 = vadd.xlane.f32.xlu0 %v518
        %v520 = vpop.xlane.xlu0 %519
        %v521 = vsel %vm391, %v370, 0.0
        %522 = vadd.xlane.f32.xlu0 %v521
        %v523 = vpop.xlane.xlu0 %522
        %v524 = vsel %vm391, %v371, 0.0
        %525 = vadd.xlane.f32.xlu0 %v524
        %v526 = vpop.xlane.xlu0 %525
        %v527 = vsel %vm391, %v372, 0.0
        %528 = vadd.xlane.f32.xlu0 %v527
        %v529 = vpop.xlane.xlu0 %528
        %v530 = vsel %vm391, %v373, 0.0
        %531 = vadd.xlane.f32.xlu0 %v530
        %v532 = vpop.xlane.xlu0 %531
        %v533 = vsel %vm391, %v374, 0.0
        %534 = vadd.xlane.f32.xlu0 %v533
        %v535 = vpop.xlane.xlu0 %534
        %v536 = vsel %vm391, %v375, 0.0
        %537 = vadd.xlane.f32.xlu0 %v536
        %v538 = vpop.xlane.xlu0 %537
        %v539 = vsel %vm391, %v376, 0.0
        %540 = vadd.xlane.f32.xlu0 %v539
        %v541 = vpop.xlane.xlu0 %540
        %v542 = vsel %vm391, %v377, 0.0
        %543 = vadd.xlane.f32.xlu0 %v542
        %v544 = vpop.xlane.xlu0 %543
        %v545 = vsel %vm391, %v378, 0.0
        %546 = vadd.xlane.f32.xlu0 %v545
        %v547 = vpop.xlane.xlu0 %546
        %v548 = vsel %vm391, %v379, 0.0
        %549 = vadd.xlane.f32.xlu0 %v548
        %v550 = vpop.xlane.xlu0 %549
        %v551 = vsel %vm391, %v380, 0.0
        %552 = vadd.xlane.f32.xlu0 %v551
        %v553 = vpop.xlane.xlu0 %552
        %v554 = vsel %vm391, %v381, 0.0
        %555 = vadd.xlane.f32.xlu0 %v554
        %v556 = vpop.xlane.xlu0 %555
        %v557 = vsel %vm391, %v382, 0.0
        %558 = vadd.xlane.f32.xlu0 %v557
        %v559 = vpop.xlane.xlu0 %558
        %v560 = vsel %vm391, %v383, 0.0
        %561 = vadd.xlane.f32.xlu0 %v560
        %v562 = vpop.xlane.xlu0 %561
        %v563 = vsel %vm391, %v384, 0.0
        %564 = vadd.xlane.f32.xlu0 %v563
        %v565 = vpop.xlane.xlu0 %564
        %v566 = vsel %vm391, %v385, 0.0
        %567 = vadd.xlane.f32.xlu0 %v566
        %v568 = vpop.xlane.xlu0 %567
        %v569 = vsel %vm391, %v386, 0.0
        %570 = vadd.xlane.f32.xlu0 %v569
        %v571 = vpop.xlane.xlu0 %570
        %v572 = vsel %vm391, %v387, 0.0
        %573 = vadd.xlane.f32.xlu0 %v572
        %v574 = vpop.xlane.xlu0 %573
        %v575 = vsel %vm391, %v388, 0.0
        %576 = vadd.xlane.f32.xlu0 %v575
        %v577 = vpop.xlane.xlu0 %576
        %v578 = vsel %vm391, %v389, 0.0
        %579 = vadd.xlane.f32.xlu0 %v578
        %v580 = vpop.xlane.xlu0 %579
        %v581 = vsel %vm391, %v390, 0.0
        %582 = vadd.xlane.f32.xlu0 %v581
        %v583 = vpop.xlane.xlu0 %582
        %v584 = vld [vmem:[%s2] sm:$0xf]
        %v649 = vlaneseq
        %v650 = vand.u32 %v649, 127
        %v651 = vlaneseq
        %v652 = vshrl.u32 %v651, 7
        %v653 = vsub.s32 %v650, %v652
        %v654 = vrot.slane %v394, %v653
        %v655 = vlaneseq
        %v656 = vshrl.u32 %v655, 7
        %v657 = vsub.s32 %v650, %v656
        %v658 = vrot.slane %v397, %v657
        %v659 = vlaneseq
        %v660 = vshrl.u32 %v659, 7
        %v661 = vsub.s32 %v650, %v660
        %v662 = vrot.slane %v400, %v661
        %v663 = vlaneseq
        %v664 = vshrl.u32 %v663, 7
        %v665 = vsub.s32 %v650, %v664
        %v666 = vrot.slane %v403, %v665
        %v667 = vlaneseq
        %v668 = vshrl.u32 %v667, 7
        %v669 = vsub.s32 %v650, %v668
        %v670 = vrot.slane %v406, %v669
        %v671 = vlaneseq
        %v672 = vshrl.u32 %v671, 7
        %v673 = vsub.s32 %v650, %v672
        %v674 = vrot.slane %v409, %v673
        %v675 = vlaneseq
        %v676 = vshrl.u32 %v675, 7
        %v677 = vsub.s32 %v650, %v676
        %v678 = vrot.slane %v412, %v677
        %v679 = vlaneseq
        %v680 = vshrl.u32 %v679, 7
        %v681 = vsub.s32 %v650, %v680
        %v682 = vrot.slane %v415, %v681
        %v683 = vlaneseq
        %v684 = vshrl.u32 %v683, 7
        %v685 = vsub.s32 %v650, %v684
        %v686 = vrot.slane %v418, %v685
        %v687 = vlaneseq
        %v688 = vshrl.u32 %v687, 7
        %v689 = vsub.s32 %v650, %v688
        %v690 = vrot.slane %v421, %v689
        %v691 = vlaneseq
        %v692 = vshrl.u32 %v691, 7
        %v693 = vsub.s32 %v650, %v692
        %v694 = vrot.slane %v424, %v693
        %v695 = vlaneseq
        %v696 = vshrl.u32 %v695, 7
        %v697 = vsub.s32 %v650, %v696
        %v698 = vrot.slane %v427, %v697
        %v699 = vlaneseq
        %v700 = vshrl.u32 %v699, 7
        %v701 = vsub.s32 %v650, %v700
        %v702 = vrot.slane %v430, %v701
        %v703 = vlaneseq
        %v704 = vshrl.u32 %v703, 7
        %v705 = vsub.s32 %v650, %v704
        %v706 = vrot.slane %v433, %v705
        %v707 = vlaneseq
        %v708 = vshrl.u32 %v707, 7
        %v709 = vsub.s32 %v650, %v708
        %v710 = vrot.slane %v436, %v709
        %v711 = vlaneseq
        %v712 = vshrl.u32 %v711, 7
        %v713 = vsub.s32 %v650, %v712
        %v714 = vrot.slane %v439, %v713
        %v715 = vlaneseq
        %v716 = vshrl.u32 %v715, 7
        %v717 = vsub.s32 %v650, %v716
        %v718 = vrot.slane %v442, %v717
        %v719 = vlaneseq
        %v720 = vshrl.u32 %v719, 7
        %v721 = vsub.s32 %v650, %v720
        %v722 = vrot.slane %v445, %v721
        %v723 = vlaneseq
        %v724 = vshrl.u32 %v723, 7
        %v725 = vsub.s32 %v650, %v724
        %v726 = vrot.slane %v448, %v725
        %v727 = vlaneseq
        %v728 = vshrl.u32 %v727, 7
        %v729 = vsub.s32 %v650, %v728
        %v730 = vrot.slane %v451, %v729
        %v731 = vlaneseq
        %v732 = vshrl.u32 %v731, 7
        %v733 = vsub.s32 %v650, %v732
        %v734 = vrot.slane %v454, %v733
        %v735 = vlaneseq
        %v736 = vshrl.u32 %v735, 7
        %v737 = vsub.s32 %v650, %v736
        %v738 = vrot.slane %v457, %v737
        %v739 = vlaneseq
        %v740 = vshrl.u32 %v739, 7
        %v741 = vsub.s32 %v650, %v740
        %v742 = vrot.slane %v460, %v741
        %v743 = vlaneseq
        %v744 = vshrl.u32 %v743, 7
        %v745 = vsub.s32 %v650, %v744
        %v746 = vrot.slane %v463, %v745
        %v747 = vlaneseq
        %v748 = vshrl.u32 %v747, 7
        %v749 = vsub.s32 %v650, %v748
        %v750 = vrot.slane %v466, %v749
        %v751 = vlaneseq
        %v752 = vshrl.u32 %v751, 7
        %v753 = vsub.s32 %v650, %v752
        %v754 = vrot.slane %v469, %v753
        %v755 = vlaneseq
        %v756 = vshrl.u32 %v755, 7
        %v757 = vsub.s32 %v650, %v756
        %v758 = vrot.slane %v472, %v757
        %v759 = vlaneseq
        %v760 = vshrl.u32 %v759, 7
        %v761 = vsub.s32 %v650, %v760
        %v762 = vrot.slane %v475, %v761
        %v763 = vlaneseq
        %v764 = vshrl.u32 %v763, 7
        %v765 = vsub.s32 %v650, %v764
        %v766 = vrot.slane %v478, %v765
        %v767 = vlaneseq
        %v768 = vshrl.u32 %v767, 7
        %v769 = vsub.s32 %v650, %v768
        %v770 = vrot.slane %v481, %v769
        %v771 = vlaneseq
        %v772 = vshrl.u32 %v771, 7
        %v773 = vsub.s32 %v650, %v772
        %v774 = vrot.slane %v484, %v773
        %v775 = vlaneseq
        %v776 = vshrl.u32 %v775, 7
        %v777 = vsub.s32 %v650, %v776
        %v778 = vrot.slane %v487, %v777
        %v779 = vlaneseq
        %v780 = vshrl.u32 %v779, 7
        %v781 = vsub.s32 %v650, %v780
        %v782 = vrot.slane %v490, %v781
        %v783 = vlaneseq
        %v784 = vshrl.u32 %v783, 7
        %v785 = vsub.s32 %v650, %v784
        %v786 = vrot.slane %v493, %v785
        %v787 = vlaneseq
        %v788 = vshrl.u32 %v787, 7
        %v789 = vsub.s32 %v650, %v788
        %v790 = vrot.slane %v496, %v789
        %v791 = vlaneseq
        %v792 = vshrl.u32 %v791, 7
        %v793 = vsub.s32 %v650, %v792
        %v794 = vrot.slane %v499, %v793
        %v795 = vlaneseq
        %v796 = vshrl.u32 %v795, 7
        %v797 = vsub.s32 %v650, %v796
        %v798 = vrot.slane %v502, %v797
        %v799 = vlaneseq
        %v800 = vshrl.u32 %v799, 7
        %v801 = vsub.s32 %v650, %v800
        %v802 = vrot.slane %v505, %v801
        %v803 = vlaneseq
        %v804 = vshrl.u32 %v803, 7
        %v805 = vsub.s32 %v650, %v804
        %v806 = vrot.slane %v508, %v805
        %v807 = vlaneseq
        %v808 = vshrl.u32 %v807, 7
        %v809 = vsub.s32 %v650, %v808
        %v810 = vrot.slane %v511, %v809
        %v811 = vlaneseq
        %v812 = vshrl.u32 %v811, 7
        %v813 = vsub.s32 %v650, %v812
        %v814 = vrot.slane %v514, %v813
        %v815 = vlaneseq
        %v816 = vshrl.u32 %v815, 7
        %v817 = vsub.s32 %v650, %v816
        %v818 = vrot.slane %v517, %v817
        %v819 = vlaneseq
        %v820 = vshrl.u32 %v819, 7
        %v821 = vsub.s32 %v650, %v820
        %v822 = vrot.slane %v520, %v821
        %v823 = vlaneseq
        %v824 = vshrl.u32 %v823, 7
        %v825 = vsub.s32 %v650, %v824
        %v826 = vrot.slane %v523, %v825
        %v827 = vlaneseq
        %v828 = vshrl.u32 %v827, 7
        %v829 = vsub.s32 %v650, %v828
        %v830 = vrot.slane %v526, %v829
        %v831 = vlaneseq
        %v832 = vshrl.u32 %v831, 7
        %v833 = vsub.s32 %v650, %v832
        %v834 = vrot.slane %v529, %v833
        %v835 = vlaneseq
        %v836 = vshrl.u32 %v835, 7
        %v837 = vsub.s32 %v650, %v836
        %v838 = vrot.slane %v532, %v837
        %v839 = vlaneseq
        %v840 = vshrl.u32 %v839, 7
        %v841 = vsub.s32 %v650, %v840
        %v842 = vrot.slane %v535, %v841
        %v843 = vlaneseq
        %v844 = vshrl.u32 %v843, 7
        %v845 = vsub.s32 %v650, %v844
        %v846 = vrot.slane %v538, %v845
        %v847 = vlaneseq
        %v848 = vshrl.u32 %v847, 7
        %v849 = vsub.s32 %v650, %v848
        %v850 = vrot.slane %v541, %v849
        %v851 = vlaneseq
        %v852 = vshrl.u32 %v851, 7
        %v853 = vsub.s32 %v650, %v852
        %v854 = vrot.slane %v544, %v853
        %v855 = vlaneseq
        %v856 = vshrl.u32 %v855, 7
        %v857 = vsub.s32 %v650, %v856
        %v858 = vrot.slane %v547, %v857
        %v859 = vlaneseq
        %v860 = vshrl.u32 %v859, 7
        %v861 = vsub.s32 %v650, %v860
        %v862 = vrot.slane %v550, %v861
        %v863 = vlaneseq
        %v864 = vshrl.u32 %v863, 7
        %v865 = vsub.s32 %v650, %v864
        %v866 = vrot.slane %v553, %v865
        %v867 = vlaneseq
        %v868 = vshrl.u32 %v867, 7
        %v869 = vsub.s32 %v650, %v868
        %v870 = vrot.slane %v556, %v869
        %v871 = vlaneseq
        %v872 = vshrl.u32 %v871, 7
        %v873 = vsub.s32 %v650, %v872
        %v874 = vrot.slane %v559, %v873
        %v875 = vlaneseq
        %v876 = vshrl.u32 %v875, 7
        %v877 = vsub.s32 %v650, %v876
        %v878 = vrot.slane %v562, %v877
        %v879 = vlaneseq
        %v880 = vshrl.u32 %v879, 7
        %v881 = vsub.s32 %v650, %v880
        %v882 = vrot.slane %v565, %v881
        %v883 = vlaneseq
        %v884 = vshrl.u32 %v883, 7
        %v885 = vsub.s32 %v650, %v884
        %v886 = vrot.slane %v568, %v885
        %v887 = vlaneseq
        %v888 = vshrl.u32 %v887, 7
        %v889 = vsub.s32 %v650, %v888
        %v890 = vrot.slane %v571, %v889
        %v891 = vlaneseq
        %v892 = vshrl.u32 %v891, 7
        %v893 = vsub.s32 %v650, %v892
        %v894 = vrot.slane %v574, %v893
        %v895 = vlaneseq
        %v896 = vshrl.u32 %v895, 7
        %v897 = vsub.s32 %v650, %v896
        %v898 = vrot.slane %v577, %v897
        %v899 = vlaneseq
        %v900 = vshrl.u32 %v899, 7
        %v901 = vsub.s32 %v650, %v900
        %v902 = vrot.slane %v580, %v901
        %v903 = vlaneseq
        %v904 = vshrl.u32 %v903, 7
        %v905 = vsub.s32 %v650, %v904
        %v906 = vrot.slane %v583, %v905
        %vm907 = vcmask 1041409
        %v908 = vsel %vm907, %v658, %v654
        %vm909 = vcmask 1042434
        %v910 = vsel %vm909, %v662, %v908
        %vm911 = vcmask 1043459
        %v912 = vsel %vm911, %v666, %v910
        %vm913 = vcmask 1044484
        %v914 = vsel %vm913, %v670, %v912
        %vm915 = vcmask 1045509
        %v916 = vsel %vm915, %v674, %v914
        %vm917 = vcmask 1046534
        %v918 = vsel %vm917, %v678, %v916
        %vm919 = vcmask 1047559
        %v920 = vsel %vm919, %v682, %v918
        %v921 = vsel %vm907, %v690, %v686
        %v922 = vsel %vm909, %v694, %v921
        %v923 = vsel %vm911, %v698, %v922
        %v924 = vsel %vm913, %v702, %v923
        %v925 = vsel %vm915, %v706, %v924
        %v926 = vsel %vm917, %v710, %v925
        %v927 = vsel %vm919, %v714, %v926
        %v928 = vsel %vm907, %v722, %v718
        %v929 = vsel %vm909, %v726, %v928
        %v930 = vsel %vm911, %v730, %v929
        %v931 = vsel %vm913, %v734, %v930
        %v932 = vsel %vm915, %v738, %v931
        %v933 = vsel %vm917, %v742, %v932
        %v934 = vsel %vm919, %v746, %v933
        %v935 = vsel %vm907, %v754, %v750
        %v936 = vsel %vm909, %v758, %v935
        %v937 = vsel %vm911, %v762, %v936
        %v938 = vsel %vm913, %v766, %v937
        %v939 = vsel %vm915, %v770, %v938
        %v940 = vsel %vm917, %v774, %v939
        %v941 = vsel %vm919, %v778, %v940
        %v942 = vsel %vm907, %v786, %v782
        %v943 = vsel %vm909, %v790, %v942
        %v944 = vsel %vm911, %v794, %v943
        %v945 = vsel %vm913, %v798, %v944
        %v946 = vsel %vm915, %v802, %v945
        %v947 = vsel %vm917, %v806, %v946
        %v948 = vsel %vm919, %v810, %v947
        %v949 = vsel %vm907, %v818, %v814
        %v950 = vsel %vm909, %v822, %v949
        %v951 = vsel %vm911, %v826, %v950
        %v952 = vsel %vm913, %v830, %v951
        %v953 = vsel %vm915, %v834, %v952
        %v954 = vsel %vm917, %v838, %v953
        %v955 = vsel %vm919, %v842, %v954
        %v956 = vsel %vm907, %v850, %v846
        %v957 = vsel %vm909, %v854, %v956
        %v958 = vsel %vm911, %v858, %v957
        %v959 = vsel %vm913, %v862, %v958
        %v960 = vsel %vm915, %v866, %v959
        %v961 = vsel %vm917, %v870, %v960
        %v962 = vsel %vm919, %v874, %v961
        %v963 = vsel %vm907, %v882, %v878
        %v964 = vsel %vm909, %v886, %v963
        %v965 = vsel %vm911, %v890, %v964
        %v966 = vsel %vm913, %v894, %v965
        %v967 = vsel %vm915, %v898, %v966
        %v968 = vsel %vm917, %v902, %v967
        %v969 = vsel %vm919, %v906, %v968
        %vm970 = vcmask 31744
        %v971 = vsel %vm970, %v920, 0
        %v973 = vsel %vm970, %v927, 0
        %v975 = vsel %vm970, %v934, 0
        %v977 = vsel %vm970, %v941, 0
        %v979 = vsel %vm970, %v948, 0
        %v981 = vsel %vm970, %v955, 0
        %v983 = vsel %vm970, %v962, 0
        %v985 = vsel %vm970, %v969, 0
        %vm987 = vcmask 1043456
        %v989 = vsel %vm987, %v584, 0
        %991 = vmatprep.subr.mxu0 0.0
        %992 = vmatpush1.msra.mxu0 %v989
        %993 = vmatprep.subr.mxu0 0.0
        %994 = vmatpush1.msra.mxu0 0.0
        %995 = vmatprep.subr.mxu0 0.0
        %996 = vmatpush1.msra.mxu0 0.0
        %997 = vmatprep.subr.mxu0 0.0
        %998 = vmatpush1.msra.mxu0 0.0
        %999 = vmatprep.subr.mxu0 0.0
        %1000 = vmatpush1.msra.mxu0 0.0
        %1001 = vmatprep.subr.mxu0 0.0
        %1002 = vmatpush1.msra.mxu0 0.0
        %1003 = vmatprep.subr.mxu0 0.0
        %1004 = vmatpush1.msra.mxu0 0.0
        %1005 = vmatprep.subr.mxu0 0.0
        %1006 = vmatpush1.msra.mxu0 0.0
        %1007 = vmatprep.subr.mxu0 0.0
        %1008 = vmatpush1.msra.mxu0 0.0
        %1009 = vmatprep.subr.mxu0 0.0
        %1010 = vmatpush1.msra.mxu0 0.0
        %1011 = vmatprep.subr.mxu0 0.0
        %1012 = vmatpush1.msra.mxu0 0.0
        %1013 = vmatprep.subr.mxu0 0.0
        %1014 = vmatpush1.msra.mxu0 0.0
        %1015 = vmatprep.subr.mxu0 0.0
        %1016 = vmatpush1.msra.mxu0 0.0
        %1017 = vmatprep.subr.mxu0 0.0
        %1018 = vmatpush1.msra.mxu0 0.0
        %1019 = vmatprep.subr.mxu0 0.0
        %1020 = vmatpush1.msra.mxu0 0.0
        %1021 = vmatprep.subr.mxu0 0.0
        %1022 = vmatpush1.msra.mxu0 0.0
        %1023 = vmatprep.subr.mxu0 0.0
        %1024 = vmatpush1.msra.mxu0 0.0
        %1025 = vmatprep.subr.mxu0 0.0
        %1026 = vmatpush1.msra.mxu0 0.0
        %1027 = vmatprep.subr.mxu0 0.0
        %1028 = vmatpush1.msra.mxu0 0.0
        %1029 = vmatprep.subr.mxu0 0.0
        %1030 = vmatpush1.msra.mxu0 0.0
        %1031 = vmatprep.subr.mxu0 0.0
        %1032 = vmatpush1.msra.mxu0 0.0
        %1033 = vmatprep.subr.mxu0 0.0
        %1034 = vmatpush1.msra.mxu0 0.0
        %1035 = vmatprep.subr.mxu0 0.0
        %1036 = vmatpush1.msra.mxu0 0.0
        %1037 = vmatprep.subr.mxu0 0.0
        %1038 = vmatpush1.msra.mxu0 0.0
        %1039 = vmatprep.subr.mxu0 0.0
        %1040 = vmatpush1.msra.mxu0 0.0
        %1041 = vmatprep.subr.mxu0 0.0
        %1042 = vmatpush1.msra.mxu0 0.0
        %1043 = vmatprep.subr.mxu0 0.0
        %1044 = vmatpush1.msra.mxu0 0.0
        %1045 = vmatprep.subr.mxu0 0.0
        %1046 = vmatpush1.msra.mxu0 0.0
        %1047 = vmatprep.subr.mxu0 0.0
        %1048 = vmatpush1.msra.mxu0 0.0
        %1049 = vmatprep.subr.mxu0 0.0
        %1050 = vmatpush1.msra.mxu0 0.0
        %1051 = vmatprep.subr.mxu0 0.0
        %1052 = vmatpush1.msra.mxu0 0.0
        %1053 = vmatprep.subr.mxu0 0.0
        %1054 = vmatpush1.msra.mxu0 0.0
        %1055 = vmatprep.mubr.f32.mxu0 0.0
        %1056 = vmatmul.mubr.f32.gmra.mrb[0].mxu0 %v971
        %v1057 = vpop.f32.mrb[0].mxu0
        %v1058 = vadd.f32 0.0, %v1057
        %v1059 = vpop.f32.mrb[0].mxu0
        %1060 = vmatprep.mubr.f32.mxu0 0.0
        %1061 = vmatmul.mubr.f32.gmra.mrb[0].mxu0 %v973
        %v1062 = vpop.f32.mrb[0].mxu0
        %v1063 = vadd.f32 0.0, %v1062
        %v1064 = vpop.f32.mrb[0].mxu0
        %1065 = vmatprep.mubr.f32.mxu0 0.0
        %1066 = vmatmul.mubr.f32.gmra.mrb[0].mxu0 %v975
        %v1067 = vpop.f32.mrb[0].mxu0
        %v1068 = vadd.f32 0.0, %v1067
        %v1069 = vpop.f32.mrb[0].mxu0
        %1070 = vmatprep.mubr.f32.mxu0 0.0
        %1071 = vmatmul.mubr.f32.gmra.mrb[0].mxu0 %v977
        %v1072 = vpop.f32.mrb[0].mxu0
        %v1073 = vadd.f32 0.0, %v1072
        %v1074 = vpop.f32.mrb[0].mxu0
        %1075 = vmatprep.mubr.f32.mxu0 0.0
        %1076 = vmatmul.mubr.f32.gmra.mrb[0].mxu0 %v979
        %v1077 = vpop.f32.mrb[0].mxu0
        %v1078 = vadd.f32 0.0, %v1077
        %v1079 = vpop.f32.mrb[0].mxu0
        %1080 = vmatprep.mubr.f32.mxu0 0.0
        %1081 = vmatmul.mubr.f32.gmra.mrb[0].mxu0 %v981
        %v1082 = vpop.f32.mrb[0].mxu0
        %v1083 = vadd.f32 0.0, %v1082
        %v1084 = vpop.f32.mrb[0].mxu0
        %1085 = vmatprep.mubr.f32.mxu0 0.0
        %1086 = vmatmul.mubr.f32.gmra.mrb[0].mxu0 %v983
        %v1087 = vpop.f32.mrb[0].mxu0
        %v1088 = vadd.f32 0.0, %v1087
        %v1089 = vpop.f32.mrb[0].mxu0
        %1090 = vmatprep.mubr.f32.mxu0 0.0
        %1091 = vmatmul.mubr.f32.gmra.mrb[0].mxu0 %v985
        %v1092 = vpop.f32.mrb[0].mxu0
        %v1093 = vadd.f32 0.0, %v1092
        %v1094 = vpop.f32.mrb[0].mxu0
        %1095 = vdwg.mxu0
        %v1096 = vld [vmem:[%s3] sm:$0xf]
        %1098 = vset.pattern.permute.xlu0 0
        %1099 = vperm.xlu0 %1098, %v1096
        %v1100 = vpop.permute.xlu0 %1099
        %v1102 = vmul.f32 %v256, %v1100
        %v1103 = vmul.f32 %v257, %v1100
        %v1104 = vmul.f32 %v258, %v1100
        %v1105 = vmul.f32 %v259, %v1100
        %v1106 = vmul.f32 %v260, %v1100
        %v1107 = vmul.f32 %v261, %v1100
        %v1108 = vmul.f32 %v262, %v1100
        %v1109 = vmul.f32 %v263, %v1100
        %v1110 = vmul.f32 %v264, %v1100
        %v1111 = vmul.f32 %v265, %v1100
        %v1112 = vmul.f32 %v266, %v1100
        %v1113 = vmul.f32 %v267, %v1100
        %v1114 = vmul.f32 %v268, %v1100
        %v1115 = vmul.f32 %v269, %v1100
        %v1116 = vmul.f32 %v270, %v1100
        %v1117 = vmul.f32 %v271, %v1100
        %v1118 = vmul.f32 %v272, %v1100
        %v1119 = vmul.f32 %v273, %v1100
        %v1120 = vmul.f32 %v274, %v1100
        %v1121 = vmul.f32 %v275, %v1100
        %v1122 = vmul.f32 %v276, %v1100
        %v1123 = vmul.f32 %v277, %v1100
        %v1124 = vmul.f32 %v278, %v1100
        %v1125 = vmul.f32 %v279, %v1100
        %v1126 = vmul.f32 %v280, %v1100
        %v1127 = vmul.f32 %v281, %v1100
        %v1128 = vmul.f32 %v282, %v1100
        %v1129 = vmul.f32 %v283, %v1100
        %v1130 = vmul.f32 %v284, %v1100
        %v1131 = vmul.f32 %v285, %v1100
        %v1132 = vmul.f32 %v286, %v1100
        %v1133 = vmul.f32 %v287, %v1100
        %v1134 = vmul.f32 %v288, %v1100
        %v1135 = vmul.f32 %v289, %v1100
        %v1136 = vmul.f32 %v290, %v1100
        %v1137 = vmul.f32 %v291, %v1100
        %v1138 = vmul.f32 %v292, %v1100
        %v1139 = vmul.f32 %v293, %v1100
        %v1140 = vmul.f32 %v294, %v1100
        %v1141 = vmul.f32 %v295, %v1100
        %v1142 = vmul.f32 %v296, %v1100
        %v1143 = vmul.f32 %v297, %v1100
        %v1144 = vmul.f32 %v298, %v1100
        %v1145 = vmul.f32 %v299, %v1100
        %v1146 = vmul.f32 %v300, %v1100
        %v1147 = vmul.f32 %v301, %v1100
        %v1148 = vmul.f32 %v302, %v1100
        %v1149 = vmul.f32 %v303, %v1100
        %v1150 = vmul.f32 %v304, %v1100
        %v1151 = vmul.f32 %v305, %v1100
        %v1152 = vmul.f32 %v306, %v1100
        %v1153 = vmul.f32 %v307, %v1100
        %v1154 = vmul.f32 %v308, %v1100
        %v1155 = vmul.f32 %v309, %v1100
        %v1156 = vmul.f32 %v310, %v1100
        %v1157 = vmul.f32 %v311, %v1100
        %v1158 = vmul.f32 %v312, %v1100
        %v1159 = vmul.f32 %v313, %v1100
        %v1160 = vmul.f32 %v314, %v1100
        %v1161 = vmul.f32 %v315, %v1100
        %v1162 = vmul.f32 %v316, %v1100
        %v1163 = vmul.f32 %v317, %v1100
        %v1164 = vmul.f32 %v318, %v1100
        %v1165 = vmul.f32 %v319, %v1100
        %v1166 = vsel %vm391, %v1102, 0.0
        %v1167 = vrot.slane %v1166, 4
        %v1168 = vadd.f32 %v1166, %v1167
        %v1169 = vrot.slane %v1168, 2
        %v1170 = vadd.f32 %v1168, %v1169
        %v1171 = vrot.slane %v1170, 1
        %v1172 = vadd.f32 %v1170, %v1171
        %v1173 = vsel %vm391, %v1103, 0.0
        %v1174 = vrot.slane %v1173, 4
        %v1175 = vadd.f32 %v1173, %v1174
        %v1176 = vrot.slane %v1175, 2
        %v1177 = vadd.f32 %v1175, %v1176
        %v1178 = vrot.slane %v1177, 1
        %v1179 = vadd.f32 %v1177, %v1178
        %v1180 = vsel %vm391, %v1104, 0.0
        %v1181 = vrot.slane %v1180, 4
        %v1182 = vadd.f32 %v1180, %v1181
        %v1183 = vrot.slane %v1182, 2
        %v1184 = vadd.f32 %v1182, %v1183
        %v1185 = vrot.slane %v1184, 1
        %v1186 = vadd.f32 %v1184, %v1185
        %v1187 = vsel %vm391, %v1105, 0.0
        %v1188 = vrot.slane %v1187, 4
        %v1189 = vadd.f32 %v1187, %v1188
        %v1190 = vrot.slane %v1189, 2
        %v1191 = vadd.f32 %v1189, %v1190
        %v1192 = vrot.slane %v1191, 1
        %v1193 = vadd.f32 %v1191, %v1192
        %v1194 = vsel %vm391, %v1106, 0.0
        %v1195 = vrot.slane %v1194, 4
        %v1196 = vadd.f32 %v1194, %v1195
        %v1197 = vrot.slane %v1196, 2
        %v1198 = vadd.f32 %v1196, %v1197
        %v1199 = vrot.slane %v1198, 1
        %v1200 = vadd.f32 %v1198, %v1199
        %v1201 = vsel %vm391, %v1107, 0.0
        %v1202 = vrot.slane %v1201, 4
        %v1203 = vadd.f32 %v1201, %v1202
        %v1204 = vrot.slane %v1203, 2
        %v1205 = vadd.f32 %v1203, %v1204
        %v1206 = vrot.slane %v1205, 1
        %v1207 = vadd.f32 %v1205, %v1206
        %v1208 = vsel %vm391, %v1108, 0.0
        %v1209 = vrot.slane %v1208, 4
        %v1210 = vadd.f32 %v1208, %v1209
        %v1211 = vrot.slane %v1210, 2
        %v1212 = vadd.f32 %v1210, %v1211
        %v1213 = vrot.slane %v1212, 1
        %v1214 = vadd.f32 %v1212, %v1213
        %v1215 = vsel %vm391, %v1109, 0.0
        %v1216 = vrot.slane %v1215, 4
        %v1217 = vadd.f32 %v1215, %v1216
        %v1218 = vrot.slane %v1217, 2
        %v1219 = vadd.f32 %v1217, %v1218
        %v1220 = vrot.slane %v1219, 1
        %v1221 = vadd.f32 %v1219, %v1220
        %v1222 = vsel %vm391, %v1110, 0.0
        %v1223 = vrot.slane %v1222, 4
        %v1224 = vadd.f32 %v1222, %v1223
        %v1225 = vrot.slane %v1224, 2
        %v1226 = vadd.f32 %v1224, %v1225
        %v1227 = vrot.slane %v1226, 1
        %v1228 = vadd.f32 %v1226, %v1227
        %v1229 = vsel %vm391, %v1111, 0.0
        %v1230 = vrot.slane %v1229, 4
        %v1231 = vadd.f32 %v1229, %v1230
        %v1232 = vrot.slane %v1231, 2
        %v1233 = vadd.f32 %v1231, %v1232
        %v1234 = vrot.slane %v1233, 1
        %v1235 = vadd.f32 %v1233, %v1234
        %v1236 = vsel %vm391, %v1112, 0.0
        %v1237 = vrot.slane %v1236, 4
        %v1238 = vadd.f32 %v1236, %v1237
        %v1239 = vrot.slane %v1238, 2
        %v1240 = vadd.f32 %v1238, %v1239
        %v1241 = vrot.slane %v1240, 1
        %v1242 = vadd.f32 %v1240, %v1241
        %v1243 = vsel %vm391, %v1113, 0.0
        %v1244 = vrot.slane %v1243, 4
        %v1245 = vadd.f32 %v1243, %v1244
        %v1246 = vrot.slane %v1245, 2
        %v1247 = vadd.f32 %v1245, %v1246
        %v1248 = vrot.slane %v1247, 1
        %v1249 = vadd.f32 %v1247, %v1248
        %v1250 = vsel %vm391, %v1114, 0.0
        %v1251 = vrot.slane %v1250, 4
        %v1252 = vadd.f32 %v1250, %v1251
        %v1253 = vrot.slane %v1252, 2
        %v1254 = vadd.f32 %v1252, %v1253
        %v1255 = vrot.slane %v1254, 1
        %v1256 = vadd.f32 %v1254, %v1255
        %v1257 = vsel %vm391, %v1115, 0.0
        %v1258 = vrot.slane %v1257, 4
        %v1259 = vadd.f32 %v1257, %v1258
        %v1260 = vrot.slane %v1259, 2
        %v1261 = vadd.f32 %v1259, %v1260
        %v1262 = vrot.slane %v1261, 1
        %v1263 = vadd.f32 %v1261, %v1262
        %v1264 = vsel %vm391, %v1116, 0.0
        %v1265 = vrot.slane %v1264, 4
        %v1266 = vadd.f32 %v1264, %v1265
        %v1267 = vrot.slane %v1266, 2
        %v1268 = vadd.f32 %v1266, %v1267
        %v1269 = vrot.slane %v1268, 1
        %v1270 = vadd.f32 %v1268, %v1269
        %v1271 = vsel %vm391, %v1117, 0.0
        %v1272 = vrot.slane %v1271, 4
        %v1273 = vadd.f32 %v1271, %v1272
        %v1274 = vrot.slane %v1273, 2
        %v1275 = vadd.f32 %v1273, %v1274
        %v1276 = vrot.slane %v1275, 1
        %v1277 = vadd.f32 %v1275, %v1276
        %v1278 = vsel %vm391, %v1118, 0.0
        %v1279 = vrot.slane %v1278, 4
        %v1280 = vadd.f32 %v1278, %v1279
        %v1281 = vrot.slane %v1280, 2
        %v1282 = vadd.f32 %v1280, %v1281
        %v1283 = vrot.slane %v1282, 1
        %v1284 = vadd.f32 %v1282, %v1283
        %v1285 = vsel %vm391, %v1119, 0.0
        %v1286 = vrot.slane %v1285, 4
        %v1287 = vadd.f32 %v1285, %v1286
        %v1288 = vrot.slane %v1287, 2
        %v1289 = vadd.f32 %v1287, %v1288
        %v1290 = vrot.slane %v1289, 1
        %v1291 = vadd.f32 %v1289, %v1290
        %v1292 = vsel %vm391, %v1120, 0.0
        %v1293 = vrot.slane %v1292, 4
        %v1294 = vadd.f32 %v1292, %v1293
        %v1295 = vrot.slane %v1294, 2
        %v1296 = vadd.f32 %v1294, %v1295
        %v1297 = vrot.slane %v1296, 1
        %v1298 = vadd.f32 %v1296, %v1297
        %v1299 = vsel %vm391, %v1121, 0.0
        %v1300 = vrot.slane %v1299, 4
        %v1301 = vadd.f32 %v1299, %v1300
        %v1302 = vrot.slane %v1301, 2
        %v1303 = vadd.f32 %v1301, %v1302
        %v1304 = vrot.slane %v1303, 1
        %v1305 = vadd.f32 %v1303, %v1304
        %v1306 = vsel %vm391, %v1122, 0.0
        %v1307 = vrot.slane %v1306, 4
        %v1308 = vadd.f32 %v1306, %v1307
        %v1309 = vrot.slane %v1308, 2
        %v1310 = vadd.f32 %v1308, %v1309
        %v1311 = vrot.slane %v1310, 1
        %v1312 = vadd.f32 %v1310, %v1311
        %v1313 = vsel %vm391, %v1123, 0.0
        %v1314 = vrot.slane %v1313, 4
        %v1315 = vadd.f32 %v1313, %v1314
        %v1316 = vrot.slane %v1315, 2
        %v1317 = vadd.f32 %v1315, %v1316
        %v1318 = vrot.slane %v1317, 1
        %v1319 = vadd.f32 %v1317, %v1318
        %v1320 = vsel %vm391, %v1124, 0.0
        %v1321 = vrot.slane %v1320, 4
        %v1322 = vadd.f32 %v1320, %v1321
        %v1323 = vrot.slane %v1322, 2
        %v1324 = vadd.f32 %v1322, %v1323
        %v1325 = vrot.slane %v1324, 1
        %v1326 = vadd.f32 %v1324, %v1325
        %v1327 = vsel %vm391, %v1125, 0.0
        %v1328 = vrot.slane %v1327, 4
        %v1329 = vadd.f32 %v1327, %v1328
        %v1330 = vrot.slane %v1329, 2
        %v1331 = vadd.f32 %v1329, %v1330
        %v1332 = vrot.slane %v1331, 1
        %v1333 = vadd.f32 %v1331, %v1332
        %v1334 = vsel %vm391, %v1126, 0.0
        %v1335 = vrot.slane %v1334, 4
        %v1336 = vadd.f32 %v1334, %v1335
        %v1337 = vrot.slane %v1336, 2
        %v1338 = vadd.f32 %v1336, %v1337
        %v1339 = vrot.slane %v1338, 1
        %v1340 = vadd.f32 %v1338, %v1339
        %v1341 = vsel %vm391, %v1127, 0.0
        %v1342 = vrot.slane %v1341, 4
        %v1343 = vadd.f32 %v1341, %v1342
        %v1344 = vrot.slane %v1343, 2
        %v1345 = vadd.f32 %v1343, %v1344
        %v1346 = vrot.slane %v1345, 1
        %v1347 = vadd.f32 %v1345, %v1346
        %v1348 = vsel %vm391, %v1128, 0.0
        %v1349 = vrot.slane %v1348, 4
        %v1350 = vadd.f32 %v1348, %v1349
        %v1351 = vrot.slane %v1350, 2
        %v1352 = vadd.f32 %v1350, %v1351
        %v1353 = vrot.slane %v1352, 1
        %v1354 = vadd.f32 %v1352, %v1353
        %v1355 = vsel %vm391, %v1129, 0.0
        %v1356 = vrot.slane %v1355, 4
        %v1357 = vadd.f32 %v1355, %v1356
        %v1358 = vrot.slane %v1357, 2
        %v1359 = vadd.f32 %v1357, %v1358
        %v1360 = vrot.slane %v1359, 1
        %v1361 = vadd.f32 %v1359, %v1360
        %v1362 = vsel %vm391, %v1130, 0.0
        %v1363 = vrot.slane %v1362, 4
        %v1364 = vadd.f32 %v1362, %v1363
        %v1365 = vrot.slane %v1364, 2
        %v1366 = vadd.f32 %v1364, %v1365
        %v1367 = vrot.slane %v1366, 1
        %v1368 = vadd.f32 %v1366, %v1367
        %v1369 = vsel %vm391, %v1131, 0.0
        %v1370 = vrot.slane %v1369, 4
        %v1371 = vadd.f32 %v1369, %v1370
        %v1372 = vrot.slane %v1371, 2
        %v1373 = vadd.f32 %v1371, %v1372
        %v1374 = vrot.slane %v1373, 1
        %v1375 = vadd.f32 %v1373, %v1374
        %v1376 = vsel %vm391, %v1132, 0.0
        %v1377 = vrot.slane %v1376, 4
        %v1378 = vadd.f32 %v1376, %v1377
        %v1379 = vrot.slane %v1378, 2
        %v1380 = vadd.f32 %v1378, %v1379
        %v1381 = vrot.slane %v1380, 1
        %v1382 = vadd.f32 %v1380, %v1381
        %v1383 = vsel %vm391, %v1133, 0.0
        %v1384 = vrot.slane %v1383, 4
        %v1385 = vadd.f32 %v1383, %v1384
        %v1386 = vrot.slane %v1385, 2
        %v1387 = vadd.f32 %v1385, %v1386
        %v1388 = vrot.slane %v1387, 1
        %v1389 = vadd.f32 %v1387, %v1388
        %v1390 = vsel %vm391, %v1134, 0.0
        %v1391 = vrot.slane %v1390, 4
        %v1392 = vadd.f32 %v1390, %v1391
        %v1393 = vrot.slane %v1392, 2
        %v1394 = vadd.f32 %v1392, %v1393
        %v1395 = vrot.slane %v1394, 1
        %v1396 = vadd.f32 %v1394, %v1395
        %v1397 = vsel %vm391, %v1135, 0.0
        %v1398 = vrot.slane %v1397, 4
        %v1399 = vadd.f32 %v1397, %v1398
        %v1400 = vrot.slane %v1399, 2
        %v1401 = vadd.f32 %v1399, %v1400
        %v1402 = vrot.slane %v1401, 1
        %v1403 = vadd.f32 %v1401, %v1402
        %v1404 = vsel %vm391, %v1136, 0.0
        %v1405 = vrot.slane %v1404, 4
        %v1406 = vadd.f32 %v1404, %v1405
        %v1407 = vrot.slane %v1406, 2
        %v1408 = vadd.f32 %v1406, %v1407
        %v1409 = vrot.slane %v1408, 1
        %v1410 = vadd.f32 %v1408, %v1409
        %v1411 = vsel %vm391, %v1137, 0.0
        %v1412 = vrot.slane %v1411, 4
        %v1413 = vadd.f32 %v1411, %v1412
        %v1414 = vrot.slane %v1413, 2
        %v1415 = vadd.f32 %v1413, %v1414
        %v1416 = vrot.slane %v1415, 1
        %v1417 = vadd.f32 %v1415, %v1416
        %v1418 = vsel %vm391, %v1138, 0.0
        %v1419 = vrot.slane %v1418, 4
        %v1420 = vadd.f32 %v1418, %v1419
        %v1421 = vrot.slane %v1420, 2
        %v1422 = vadd.f32 %v1420, %v1421
        %v1423 = vrot.slane %v1422, 1
        %v1424 = vadd.f32 %v1422, %v1423
        %v1425 = vsel %vm391, %v1139, 0.0
        %v1426 = vrot.slane %v1425, 4
        %v1427 = vadd.f32 %v1425, %v1426
        %v1428 = vrot.slane %v1427, 2
        %v1429 = vadd.f32 %v1427, %v1428
        %v1430 = vrot.slane %v1429, 1
        %v1431 = vadd.f32 %v1429, %v1430
        %v1432 = vsel %vm391, %v1140, 0.0
        %v1433 = vrot.slane %v1432, 4
        %v1434 = vadd.f32 %v1432, %v1433
        %v1435 = vrot.slane %v1434, 2
        %v1436 = vadd.f32 %v1434, %v1435
        %v1437 = vrot.slane %v1436, 1
        %v1438 = vadd.f32 %v1436, %v1437
        %v1439 = vsel %vm391, %v1141, 0.0
        %v1440 = vrot.slane %v1439, 4
        %v1441 = vadd.f32 %v1439, %v1440
        %v1442 = vrot.slane %v1441, 2
        %v1443 = vadd.f32 %v1441, %v1442
        %v1444 = vrot.slane %v1443, 1
        %v1445 = vadd.f32 %v1443, %v1444
        %v1446 = vsel %vm391, %v1142, 0.0
        %v1447 = vrot.slane %v1446, 4
        %v1448 = vadd.f32 %v1446, %v1447
        %v1449 = vrot.slane %v1448, 2
        %v1450 = vadd.f32 %v1448, %v1449
        %v1451 = vrot.slane %v1450, 1
        %v1452 = vadd.f32 %v1450, %v1451
        %v1453 = vsel %vm391, %v1143, 0.0
        %v1454 = vrot.slane %v1453, 4
        %v1455 = vadd.f32 %v1453, %v1454
        %v1456 = vrot.slane %v1455, 2
        %v1457 = vadd.f32 %v1455, %v1456
        %v1458 = vrot.slane %v1457, 1
        %v1459 = vadd.f32 %v1457, %v1458
        %v1460 = vsel %vm391, %v1144, 0.0
        %v1461 = vrot.slane %v1460, 4
        %v1462 = vadd.f32 %v1460, %v1461
        %v1463 = vrot.slane %v1462, 2
        %v1464 = vadd.f32 %v1462, %v1463
        %v1465 = vrot.slane %v1464, 1
        %v1466 = vadd.f32 %v1464, %v1465
        %v1467 = vsel %vm391, %v1145, 0.0
        %v1468 = vrot.slane %v1467, 4
        %v1469 = vadd.f32 %v1467, %v1468
        %v1470 = vrot.slane %v1469, 2
        %v1471 = vadd.f32 %v1469, %v1470
        %v1472 = vrot.slane %v1471, 1
        %v1473 = vadd.f32 %v1471, %v1472
        %v1474 = vsel %vm391, %v1146, 0.0
        %v1475 = vrot.slane %v1474, 4
        %v1476 = vadd.f32 %v1474, %v1475
        %v1477 = vrot.slane %v1476, 2
        %v1478 = vadd.f32 %v1476, %v1477
        %v1479 = vrot.slane %v1478, 1
        %v1480 = vadd.f32 %v1478, %v1479
        %v1481 = vsel %vm391, %v1147, 0.0
        %v1482 = vrot.slane %v1481, 4
        %v1483 = vadd.f32 %v1481, %v1482
        %v1484 = vrot.slane %v1483, 2
        %v1485 = vadd.f32 %v1483, %v1484
        %v1486 = vrot.slane %v1485, 1
        %v1487 = vadd.f32 %v1485, %v1486
        %v1488 = vsel %vm391, %v1148, 0.0
        %v1489 = vrot.slane %v1488, 4
        %v1490 = vadd.f32 %v1488, %v1489
        %v1491 = vrot.slane %v1490, 2
        %v1492 = vadd.f32 %v1490, %v1491
        %v1493 = vrot.slane %v1492, 1
        %v1494 = vadd.f32 %v1492, %v1493
        %v1495 = vsel %vm391, %v1149, 0.0
        %v1496 = vrot.slane %v1495, 4
        %v1497 = vadd.f32 %v1495, %v1496
        %v1498 = vrot.slane %v1497, 2
        %v1499 = vadd.f32 %v1497, %v1498
        %v1500 = vrot.slane %v1499, 1
        %v1501 = vadd.f32 %v1499, %v1500
        %v1502 = vsel %vm391, %v1150, 0.0
        %v1503 = vrot.slane %v1502, 4
        %v1504 = vadd.f32 %v1502, %v1503
        %v1505 = vrot.slane %v1504, 2
        %v1506 = vadd.f32 %v1504, %v1505
        %v1507 = vrot.slane %v1506, 1
        %v1508 = vadd.f32 %v1506, %v1507
        %v1509 = vsel %vm391, %v1151, 0.0
        %v1510 = vrot.slane %v1509, 4
        %v1511 = vadd.f32 %v1509, %v1510
        %v1512 = vrot.slane %v1511, 2
        %v1513 = vadd.f32 %v1511, %v1512
        %v1514 = vrot.slane %v1513, 1
        %v1515 = vadd.f32 %v1513, %v1514
        %v1516 = vsel %vm391, %v1152, 0.0
        %v1517 = vrot.slane %v1516, 4
        %v1518 = vadd.f32 %v1516, %v1517
        %v1519 = vrot.slane %v1518, 2
        %v1520 = vadd.f32 %v1518, %v1519
        %v1521 = vrot.slane %v1520, 1
        %v1522 = vadd.f32 %v1520, %v1521
        %v1523 = vsel %vm391, %v1153, 0.0
        %v1524 = vrot.slane %v1523, 4
        %v1525 = vadd.f32 %v1523, %v1524
        %v1526 = vrot.slane %v1525, 2
        %v1527 = vadd.f32 %v1525, %v1526
        %v1528 = vrot.slane %v1527, 1
        %v1529 = vadd.f32 %v1527, %v1528
        %v1530 = vsel %vm391, %v1154, 0.0
        %v1531 = vrot.slane %v1530, 4
        %v1532 = vadd.f32 %v1530, %v1531
        %v1533 = vrot.slane %v1532, 2
        %v1534 = vadd.f32 %v1532, %v1533
        %v1535 = vrot.slane %v1534, 1
        %v1536 = vadd.f32 %v1534, %v1535
        %v1537 = vsel %vm391, %v1155, 0.0
        %v1538 = vrot.slane %v1537, 4
        %v1539 = vadd.f32 %v1537, %v1538
        %v1540 = vrot.slane %v1539, 2
        %v1541 = vadd.f32 %v1539, %v1540
        %v1542 = vrot.slane %v1541, 1
        %v1543 = vadd.f32 %v1541, %v1542
        %v1544 = vsel %vm391, %v1156, 0.0
        %v1545 = vrot.slane %v1544, 4
        %v1546 = vadd.f32 %v1544, %v1545
        %v1547 = vrot.slane %v1546, 2
        %v1548 = vadd.f32 %v1546, %v1547
        %v1549 = vrot.slane %v1548, 1
        %v1550 = vadd.f32 %v1548, %v1549
        %v1551 = vsel %vm391, %v1157, 0.0
        %v1552 = vrot.slane %v1551, 4
        %v1553 = vadd.f32 %v1551, %v1552
        %v1554 = vrot.slane %v1553, 2
        %v1555 = vadd.f32 %v1553, %v1554
        %v1556 = vrot.slane %v1555, 1
        %v1557 = vadd.f32 %v1555, %v1556
        %v1558 = vsel %vm391, %v1158, 0.0
        %v1559 = vrot.slane %v1558, 4
        %v1560 = vadd.f32 %v1558, %v1559
        %v1561 = vrot.slane %v1560, 2
        %v1562 = vadd.f32 %v1560, %v1561
        %v1563 = vrot.slane %v1562, 1
        %v1564 = vadd.f32 %v1562, %v1563
        %v1565 = vsel %vm391, %v1159, 0.0
        %v1566 = vrot.slane %v1565, 4
        %v1567 = vadd.f32 %v1565, %v1566
        %v1568 = vrot.slane %v1567, 2
        %v1569 = vadd.f32 %v1567, %v1568
        %v1570 = vrot.slane %v1569, 1
        %v1571 = vadd.f32 %v1569, %v1570
        %v1572 = vsel %vm391, %v1160, 0.0
        %v1573 = vrot.slane %v1572, 4
        %v1574 = vadd.f32 %v1572, %v1573
        %v1575 = vrot.slane %v1574, 2
        %v1576 = vadd.f32 %v1574, %v1575
        %v1577 = vrot.slane %v1576, 1
        %v1578 = vadd.f32 %v1576, %v1577
        %v1579 = vsel %vm391, %v1161, 0.0
        %v1580 = vrot.slane %v1579, 4
        %v1581 = vadd.f32 %v1579, %v1580
        %v1582 = vrot.slane %v1581, 2
        %v1583 = vadd.f32 %v1581, %v1582
        %v1584 = vrot.slane %v1583, 1
        %v1585 = vadd.f32 %v1583, %v1584
        %v1586 = vsel %vm391, %v1162, 0.0
        %v1587 = vrot.slane %v1586, 4
        %v1588 = vadd.f32 %v1586, %v1587
        %v1589 = vrot.slane %v1588, 2
        %v1590 = vadd.f32 %v1588, %v1589
        %v1591 = vrot.slane %v1590, 1
        %v1592 = vadd.f32 %v1590, %v1591
        %v1593 = vsel %vm391, %v1163, 0.0
        %v1594 = vrot.slane %v1593, 4
        %v1595 = vadd.f32 %v1593, %v1594
        %v1596 = vrot.slane %v1595, 2
        %v1597 = vadd.f32 %v1595, %v1596
        %v1598 = vrot.slane %v1597, 1
        %v1599 = vadd.f32 %v1597, %v1598
        %v1600 = vsel %vm391, %v1164, 0.0
        %v1601 = vrot.slane %v1600, 4
        %v1602 = vadd.f32 %v1600, %v1601
        %v1603 = vrot.slane %v1602, 2
        %v1604 = vadd.f32 %v1602, %v1603
        %v1605 = vrot.slane %v1604, 1
        %v1606 = vadd.f32 %v1604, %v1605
        %v1607 = vsel %vm391, %v1165, 0.0
        %v1608 = vrot.slane %v1607, 4
        %v1609 = vadd.f32 %v1607, %v1608
        %v1610 = vrot.slane %v1609, 2
        %v1611 = vadd.f32 %v1609, %v1610
        %v1612 = vrot.slane %v1611, 1
        %v1613 = vadd.f32 %v1611, %v1612
        %v1614 = vld [vmem:[%s4] sm:$0xff]
        %v1615 = vld [vmem:[%s4 + $0x8] sm:$0xff]
        %v1632 = vsel %vm907, %v1179, %v1172
        %v1633 = vsel %vm909, %v1186, %v1632
        %v1634 = vsel %vm911, %v1193, %v1633
        %v1635 = vsel %vm913, %v1200, %v1634
        %v1636 = vsel %vm915, %v1207, %v1635
        %v1637 = vsel %vm917, %v1214, %v1636
        %v1638 = vsel %vm919, %v1221, %v1637
        %v1639 = vsel %vm907, %v1235, %v1228
        %v1640 = vsel %vm909, %v1242, %v1639
        %v1641 = vsel %vm911, %v1249, %v1640
        %v1642 = vsel %vm913, %v1256, %v1641
        %v1643 = vsel %vm915, %v1263, %v1642
        %v1644 = vsel %vm917, %v1270, %v1643
        %v1645 = vsel %vm919, %v1277, %v1644
        %vm1646 = vcmask 64512
        %v1648 = vsel %vm1646, %v1058, 0
        %v1651 = vsel %vm1646, %v1063, 0
        %v1653 = vsel %vm1646, %v1638, 0
        %v1655 = vsel %vm1646, %v1645, 0
        %1657 = vmatprep.subr.mxu0 0.0
        %1658 = vmatpush1.xpose.msra.mxu0 %v1653
        %1659 = vmatprep.subr.mxu0 0.0
        %1660 = vmatpush1.xpose.msra.mxu0 %v1655
        %1661 = vmatprep.subr.mxu0 0.0
        %1662 = vmatpush1.xpose.msra.mxu0 0.0
        %1663 = vmatprep.subr.mxu0 0.0
        %1664 = vmatpush1.xpose.msra.mxu0 0.0
        %1665 = vmatprep.subr.mxu0 0.0
        %1666 = vmatpush1.xpose.msra.mxu0 0.0
        %1667 = vmatprep.subr.mxu0 0.0
        %1668 = vmatpush1.xpose.msra.mxu0 0.0
        %1669 = vmatprep.subr.mxu0 0.0
        %1670 = vmatpush1.xpose.msra.mxu0 0.0
        %1671 = vmatprep.subr.mxu0 0.0
        %1672 = vmatpush1.xpose.msra.mxu0 0.0
        %1673 = vmatprep.subr.mxu0 0.0
        %1674 = vmatpush1.xpose.msra.mxu0 0.0
        %1675 = vmatprep.subr.mxu0 0.0
        %1676 = vmatpush1.xpose.msra.mxu0 0.0
        %1677 = vmatprep.subr.mxu0 0.0
        %1678 = vmatpush1.xpose.msra.mxu0 0.0
        %1679 = vmatprep.subr.mxu0 0.0
        %1680 = vmatpush1.xpose.msra.mxu0 0.0
        %1681 = vmatprep.subr.mxu0 0.0
        %1682 = vmatpush1.xpose.msra.mxu0 0.0
        %1683 = vmatprep.subr.mxu0 0.0
        %1684 = vmatpush1.xpose.msra.mxu0 0.0
        %1685 = vmatprep.subr.mxu0 0.0
        %1686 = vmatpush1.xpose.msra.mxu0 0.0
        %1687 = vmatprep.subr.mxu0 0.0
        %1688 = vmatpush1.xpose.msra.mxu0 0.0
        %1689 = vmatprep.subr.mxu0 0.0
        %1690 = vmatpush1.xpose.msra.mxu0 0.0
        %1691 = vmatprep.subr.mxu0 0.0
        %1692 = vmatpush1.xpose.msra.mxu0 0.0
        %1693 = vmatprep.subr.mxu0 0.0
        %1694 = vmatpush1.xpose.msra.mxu0 0.0
        %1695 = vmatprep.subr.mxu0 0.0
        %1696 = vmatpush1.xpose.msra.mxu0 0.0
        %1697 = vmatprep.subr.mxu0 0.0
        %1698 = vmatpush1.xpose.msra.mxu0 0.0
        %1699 = vmatprep.subr.mxu0 0.0
        %1700 = vmatpush1.xpose.msra.mxu0 0.0
        %1701 = vmatprep.subr.mxu0 0.0
        %1702 = vmatpush1.xpose.msra.mxu0 0.0
        %1703 = vmatprep.subr.mxu0 0.0
        %1704 = vmatpush1.xpose.msra.mxu0 0.0
        %1705 = vmatprep.subr.mxu0 0.0
        %1706 = vmatpush1.xpose.msra.mxu0 0.0
        %1707 = vmatprep.subr.mxu0 0.0
        %1708 = vmatpush1.xpose.msra.mxu0 0.0
        %1709 = vmatprep.subr.mxu0 0.0
        %1710 = vmatpush1.xpose.msra.mxu0 0.0
        %1711 = vmatprep.subr.mxu0 0.0
        %1712 = vmatpush1.xpose.msra.mxu0 0.0
        %1713 = vmatprep.subr.mxu0 0.0
        %1714 = vmatpush1.xpose.msra.mxu0 0.0
        %1715 = vmatprep.subr.mxu0 0.0
        %1716 = vmatpush1.xpose.msra.mxu0 0.0
        %1717 = vmatprep.subr.mxu0 0.0
        %1718 = vmatpush1.xpose.msra.mxu0 0.0
        %1719 = vmatprep.subr.mxu0 0.0
        %1720 = vmatpush1.xpose.msra.mxu0 0.0
        %1721 = vmatprep.mubr.f32.mxu0 0.0
        %1722 = vmatmul.mubr.f32.gmra.mrb[0].mxu0 %v1648
        %v1723 = vpop.f32.mrb[0].mxu0
        %v1724 = vadd.f32 %v1614, %v1723
        %v1725 = vpop.f32.mrb[0].mxu0
        %1726 = vmatprep.mubr.f32.mxu0 0.0
        %1727 = vmatmul.mubr.f32.gmra.mrb[0].mxu0 %v1651
        %v1728 = vpop.f32.mrb[0].mxu0
        %v1729 = vadd.f32 %v1615, %v1728
        %v1730 = vpop.f32.mrb[0].mxu0
        %1731 = vdwg.mxu0
        %v1748 = vsel %vm907, %v1291, %v1284
        %v1749 = vsel %vm909, %v1298, %v1748
        %v1750 = vsel %vm911, %v1305, %v1749
        %v1751 = vsel %vm913, %v1312, %v1750
        %v1752 = vsel %vm915, %v1319, %v1751
        %v1753 = vsel %vm917, %v1326, %v1752
        %v1754 = vsel %vm919, %v1333, %v1753
        %v1755 = vsel %vm907, %v1347, %v1340
        %v1756 = vsel %vm909, %v1354, %v1755
        %v1757 = vsel %vm911, %v1361, %v1756
        %v1758 = vsel %vm913, %v1368, %v1757
        %v1759 = vsel %vm915, %v1375, %v1758
        %v1760 = vsel %vm917, %v1382, %v1759
        %v1761 = vsel %vm919, %v1389, %v1760
        %v1763 = vsel %vm1646, %v1068, 0
        %v1766 = vsel %vm1646, %v1073, 0
        %v1768 = vsel %vm1646, %v1754, 0
        %v1770 = vsel %vm1646, %v1761, 0
        %1772 = vmatprep.subr.mxu0 0.0
        %1773 = vmatpush1.xpose.msra.mxu0 %v1768
        %1774 = vmatprep.subr.mxu0 0.0
        %1775 = vmatpush1.xpose.msra.mxu0 %v1770
        %1776 = vmatprep.subr.mxu0 0.0
        %1777 = vmatpush1.xpose.msra.mxu0 0.0
        %1778 = vmatprep.subr.mxu0 0.0
        %1779 = vmatpush1.xpose.msra.mxu0 0.0
        %1780 = vmatprep.subr.mxu0 0.0
        %1781 = vmatpush1.xpose.msra.mxu0 0.0
        %1782 = vmatprep.subr.mxu0 0.0
        %1783 = vmatpush1.xpose.msra.mxu0 0.0
        %1784 = vmatprep.subr.mxu0 0.0
        %1785 = vmatpush1.xpose.msra.mxu0 0.0
        %1786 = vmatprep.subr.mxu0 0.0
        %1787 = vmatpush1.xpose.msra.mxu0 0.0
        %1788 = vmatprep.subr.mxu0 0.0
        %1789 = vmatpush1.xpose.msra.mxu0 0.0
        %1790 = vmatprep.subr.mxu0 0.0
        %1791 = vmatpush1.xpose.msra.mxu0 0.0
        %1792 = vmatprep.subr.mxu0 0.0
        %1793 = vmatpush1.xpose.msra.mxu0 0.0
        %1794 = vmatprep.subr.mxu0 0.0
        %1795 = vmatpush1.xpose.msra.mxu0 0.0
        %1796 = vmatprep.subr.mxu0 0.0
        %1797 = vmatpush1.xpose.msra.mxu0 0.0
        %1798 = vmatprep.subr.mxu0 0.0
        %1799 = vmatpush1.xpose.msra.mxu0 0.0
        %1800 = vmatprep.subr.mxu0 0.0
        %1801 = vmatpush1.xpose.msra.mxu0 0.0
        %1802 = vmatprep.subr.mxu0 0.0
        %1803 = vmatpush1.xpose.msra.mxu0 0.0
        %1804 = vmatprep.subr.mxu0 0.0
        %1805 = vmatpush1.xpose.msra.mxu0 0.0
        %1806 = vmatprep.subr.mxu0 0.0
        %1807 = vmatpush1.xpose.msra.mxu0 0.0
        %1808 = vmatprep.subr.mxu0 0.0
        %1809 = vmatpush1.xpose.msra.mxu0 0.0
        %1810 = vmatprep.subr.mxu0 0.0
        %1811 = vmatpush1.xpose.msra.mxu0 0.0
        %1812 = vmatprep.subr.mxu0 0.0
        %1813 = vmatpush1.xpose.msra.mxu0 0.0
        %1814 = vmatprep.subr.mxu0 0.0
        %1815 = vmatpush1.xpose.msra.mxu0 0.0
        %1816 = vmatprep.subr.mxu0 0.0
        %1817 = vmatpush1.xpose.msra.mxu0 0.0
        %1818 = vmatprep.subr.mxu0 0.0
        %1819 = vmatpush1.xpose.msra.mxu0 0.0
        %1820 = vmatprep.subr.mxu0 0.0
        %1821 = vmatpush1.xpose.msra.mxu0 0.0
        %1822 = vmatprep.subr.mxu0 0.0
        %1823 = vmatpush1.xpose.msra.mxu0 0.0
        %1824 = vmatprep.subr.mxu0 0.0
        %1825 = vmatpush1.xpose.msra.mxu0 0.0
        %1826 = vmatprep.subr.mxu0 0.0
        %1827 = vmatpush1.xpose.msra.mxu0 0.0
        %1828 = vmatprep.subr.mxu0 0.0
        %1829 = vmatpush1.xpose.msra.mxu0 0.0
        %1830 = vmatprep.subr.mxu0 0.0
        %1831 = vmatpush1.xpose.msra.mxu0 0.0
        %1832 = vmatprep.subr.mxu0 0.0
        %1833 = vmatpush1.xpose.msra.mxu0 0.0
        %1834 = vmatprep.subr.mxu0 0.0
        %1835 = vmatpush1.xpose.msra.mxu0 0.0
        %1836 = vmatprep.mubr.f32.mxu0 0.0
        %1837 = vmatmul.mubr.f32.gmra.mrb[0].mxu0 %v1763
        %v1838 = vpop.f32.mrb[0].mxu0
        %v1839 = vadd.f32 %v1614, %v1838
        %v1840 = vpop.f32.mrb[0].mxu0
        %1841 = vmatprep.mubr.f32.mxu0 0.0
        %1842 = vmatmul.mubr.f32.gmra.mrb[0].mxu0 %v1766
        %v1843 = vpop.f32.mrb[0].mxu0
        %v1844 = vadd.f32 %v1615, %v1843
        %v1845 = vpop.f32.mrb[0].mxu0
        %1846 = vdwg.mxu0
        %v1863 = vsel %vm907, %v1403, %v1396
        %v1864 = vsel %vm909, %v1410, %v1863
        %v1865 = vsel %vm911, %v1417, %v1864
        %v1866 = vsel %vm913, %v1424, %v1865
        %v1867 = vsel %vm915, %v1431, %v1866
        %v1868 = vsel %vm917, %v1438, %v1867
        %v1869 = vsel %vm919, %v1445, %v1868
        %v1870 = vsel %vm907, %v1459, %v1452
        %v1871 = vsel %vm909, %v1466, %v1870
        %v1872 = vsel %vm911, %v1473, %v1871
        %v1873 = vsel %vm913, %v1480, %v1872
        %v1874 = vsel %vm915, %v1487, %v1873
        %v1875 = vsel %vm917, %v1494, %v1874
        %v1876 = vsel %vm919, %v1501, %v1875
        %v1878 = vsel %vm1646, %v1078, 0
        %v1881 = vsel %vm1646, %v1083, 0
        %v1883 = vsel %vm1646, %v1869, 0
        %v1885 = vsel %vm1646, %v1876, 0
        %1887 = vmatprep.subr.mxu0 0.0
        %1888 = vmatpush1.xpose.msra.mxu0 %v1883
        %1889 = vmatprep.subr.mxu0 0.0
        %1890 = vmatpush1.xpose.msra.mxu0 %v1885
        %1891 = vmatprep.subr.mxu0 0.0
        %1892 = vmatpush1.xpose.msra.mxu0 0.0
        %1893 = vmatprep.subr.mxu0 0.0
        %1894 = vmatpush1.xpose.msra.mxu0 0.0
        %1895 = vmatprep.subr.mxu0 0.0
        %1896 = vmatpush1.xpose.msra.mxu0 0.0
        %1897 = vmatprep.subr.mxu0 0.0
        %1898 = vmatpush1.xpose.msra.mxu0 0.0
        %1899 = vmatprep.subr.mxu0 0.0
        %1900 = vmatpush1.xpose.msra.mxu0 0.0
        %1901 = vmatprep.subr.mxu0 0.0
        %1902 = vmatpush1.xpose.msra.mxu0 0.0
        %1903 = vmatprep.subr.mxu0 0.0
        %1904 = vmatpush1.xpose.msra.mxu0 0.0
        %1905 = vmatprep.subr.mxu0 0.0
        %1906 = vmatpush1.xpose.msra.mxu0 0.0
        %1907 = vmatprep.subr.mxu0 0.0
        %1908 = vmatpush1.xpose.msra.mxu0 0.0
        %1909 = vmatprep.subr.mxu0 0.0
        %1910 = vmatpush1.xpose.msra.mxu0 0.0
        %1911 = vmatprep.subr.mxu0 0.0
        %1912 = vmatpush1.xpose.msra.mxu0 0.0
        %1913 = vmatprep.subr.mxu0 0.0
        %1914 = vmatpush1.xpose.msra.mxu0 0.0
        %1915 = vmatprep.subr.mxu0 0.0
        %1916 = vmatpush1.xpose.msra.mxu0 0.0
        %1917 = vmatprep.subr.mxu0 0.0
        %1918 = vmatpush1.xpose.msra.mxu0 0.0
        %1919 = vmatprep.subr.mxu0 0.0
        %1920 = vmatpush1.xpose.msra.mxu0 0.0
        %1921 = vmatprep.subr.mxu0 0.0
        %1922 = vmatpush1.xpose.msra.mxu0 0.0
        %1923 = vmatprep.subr.mxu0 0.0
        %1924 = vmatpush1.xpose.msra.mxu0 0.0
        %1925 = vmatprep.subr.mxu0 0.0
        %1926 = vmatpush1.xpose.msra.mxu0 0.0
        %1927 = vmatprep.subr.mxu0 0.0
        %1928 = vmatpush1.xpose.msra.mxu0 0.0
        %1929 = vmatprep.subr.mxu0 0.0
        %1930 = vmatpush1.xpose.msra.mxu0 0.0
        %1931 = vmatprep.subr.mxu0 0.0
        %1932 = vmatpush1.xpose.msra.mxu0 0.0
        %1933 = vmatprep.subr.mxu0 0.0
        %1934 = vmatpush1.xpose.msra.mxu0 0.0
        %1935 = vmatprep.subr.mxu0 0.0
        %1936 = vmatpush1.xpose.msra.mxu0 0.0
        %1937 = vmatprep.subr.mxu0 0.0
        %1938 = vmatpush1.xpose.msra.mxu0 0.0
        %1939 = vmatprep.subr.mxu0 0.0
        %1940 = vmatpush1.xpose.msra.mxu0 0.0
        %1941 = vmatprep.subr.mxu0 0.0
        %1942 = vmatpush1.xpose.msra.mxu0 0.0
        %1943 = vmatprep.subr.mxu0 0.0
        %1944 = vmatpush1.xpose.msra.mxu0 0.0
        %1945 = vmatprep.subr.mxu0 0.0
        %1946 = vmatpush1.xpose.msra.mxu0 0.0
        %1947 = vmatprep.subr.mxu0 0.0
        %1948 = vmatpush1.xpose.msra.mxu0 0.0
        %1949 = vmatprep.subr.mxu0 0.0
        %1950 = vmatpush1.xpose.msra.mxu0 0.0
        %1951 = vmatprep.mubr.f32.mxu0 0.0
        %1952 = vmatmul.mubr.f32.gmra.mrb[0].mxu0 %v1878
        %v1953 = vpop.f32.mrb[0].mxu0
        %v1954 = vadd.f32 %v1614, %v1953
        %v1955 = vpop.f32.mrb[0].mxu0
        %1956 = vmatprep.mubr.f32.mxu0 0.0
        %1957 = vmatmul.mubr.f32.gmra.mrb[0].mxu0 %v1881
        %v1958 = vpop.f32.mrb[0].mxu0
        %v1959 = vadd.f32 %v1615, %v1958
        %v1960 = vpop.f32.mrb[0].mxu0
        %1961 = vdwg.mxu0
        %v1978 = vsel %vm907, %v1515, %v1508
        %v1979 = vsel %vm909, %v1522, %v1978
        %v1980 = vsel %vm911, %v1529, %v1979
        %v1981 = vsel %vm913, %v1536, %v1980
        %v1982 = vsel %vm915, %v1543, %v1981
        %v1983 = vsel %vm917, %v1550, %v1982
        %v1984 = vsel %vm919, %v1557, %v1983
        %v1985 = vsel %vm907, %v1571, %v1564
        %v1986 = vsel %vm909, %v1578, %v1985
        %v1987 = vsel %vm911, %v1585, %v1986
        %v1988 = vsel %vm913, %v1592, %v1987
        %v1989 = vsel %vm915, %v1599, %v1988
        %v1990 = vsel %vm917, %v1606, %v1989
        %v1991 = vsel %vm919, %v1613, %v1990
        %v1993 = vsel %vm1646, %v1088, 0
        %v1996 = vsel %vm1646, %v1093, 0
        %v1998 = vsel %vm1646, %v1984, 0
        %v2000 = vsel %vm1646, %v1991, 0
        %2002 = vmatprep.subr.mxu0 0.0
        %2003 = vmatpush1.xpose.msra.mxu0 %v1998
        %2004 = vmatprep.subr.mxu0 0.0
        %2005 = vmatpush1.xpose.msra.mxu0 %v2000
        %2006 = vmatprep.subr.mxu0 0.0
        %2007 = vmatpush1.xpose.msra.mxu0 0.0
        %2008 = vmatprep.subr.mxu0 0.0
        %2009 = vmatpush1.xpose.msra.mxu0 0.0
        %2010 = vmatprep.subr.mxu0 0.0
        %2011 = vmatpush1.xpose.msra.mxu0 0.0
        %2012 = vmatprep.subr.mxu0 0.0
        %2013 = vmatpush1.xpose.msra.mxu0 0.0
        %2014 = vmatprep.subr.mxu0 0.0
        %2015 = vmatpush1.xpose.msra.mxu0 0.0
        %2016 = vmatprep.subr.mxu0 0.0
        %2017 = vmatpush1.xpose.msra.mxu0 0.0
        %2018 = vmatprep.subr.mxu0 0.0
        %2019 = vmatpush1.xpose.msra.mxu0 0.0
        %2020 = vmatprep.subr.mxu0 0.0
        %2021 = vmatpush1.xpose.msra.mxu0 0.0
        %2022 = vmatprep.subr.mxu0 0.0
        %2023 = vmatpush1.xpose.msra.mxu0 0.0
        %2024 = vmatprep.subr.mxu0 0.0
        %2025 = vmatpush1.xpose.msra.mxu0 0.0
        %2026 = vmatprep.subr.mxu0 0.0
        %2027 = vmatpush1.xpose.msra.mxu0 0.0
        %2028 = vmatprep.subr.mxu0 0.0
        %2029 = vmatpush1.xpose.msra.mxu0 0.0
        %2030 = vmatprep.subr.mxu0 0.0
        %2031 = vmatpush1.xpose.msra.mxu0 0.0
        %2032 = vmatprep.subr.mxu0 0.0
        %2033 = vmatpush1.xpose.msra.mxu0 0.0
        %2034 = vmatprep.subr.mxu0 0.0
        %2035 = vmatpush1.xpose.msra.mxu0 0.0
        %2036 = vmatprep.subr.mxu0 0.0
        %2037 = vmatpush1.xpose.msra.mxu0 0.0
        %2038 = vmatprep.subr.mxu0 0.0
        %2039 = vmatpush1.xpose.msra.mxu0 0.0
        %2040 = vmatprep.subr.mxu0 0.0
        %2041 = vmatpush1.xpose.msra.mxu0 0.0
        %2042 = vmatprep.subr.mxu0 0.0
        %2043 = vmatpush1.xpose.msra.mxu0 0.0
        %2044 = vmatprep.subr.mxu0 0.0
        %2045 = vmatpush1.xpose.msra.mxu0 0.0
        %2046 = vmatprep.subr.mxu0 0.0
        %2047 = vmatpush1.xpose.msra.mxu0 0.0
        %2048 = vmatprep.subr.mxu0 0.0
        %2049 = vmatpush1.xpose.msra.mxu0 0.0
        %2050 = vmatprep.subr.mxu0 0.0
        %2051 = vmatpush1.xpose.msra.mxu0 0.0
        %2052 = vmatprep.subr.mxu0 0.0
        %2053 = vmatpush1.xpose.msra.mxu0 0.0
        %2054 = vmatprep.subr.mxu0 0.0
        %2055 = vmatpush1.xpose.msra.mxu0 0.0
        %2056 = vmatprep.subr.mxu0 0.0
        %2057 = vmatpush1.xpose.msra.mxu0 0.0
        %2058 = vmatprep.subr.mxu0 0.0
        %2059 = vmatpush1.xpose.msra.mxu0 0.0
        %2060 = vmatprep.subr.mxu0 0.0
        %2061 = vmatpush1.xpose.msra.mxu0 0.0
        %2062 = vmatprep.subr.mxu0 0.0
        %2063 = vmatpush1.xpose.msra.mxu0 0.0
        %2064 = vmatprep.subr.mxu0 0.0
        %2065 = vmatpush1.xpose.msra.mxu0 0.0
        %2066 = vmatprep.mubr.f32.mxu0 0.0
        %2067 = vmatmul.mubr.f32.gmra.mrb[0].mxu0 %v1993
        %v2068 = vpop.f32.mrb[0].mxu0
        %v2069 = vadd.f32 %v1614, %v2068
        %v2070 = vpop.f32.mrb[0].mxu0
        %2071 = vmatprep.mubr.f32.mxu0 0.0
        %2072 = vmatmul.mubr.f32.gmra.mrb[0].mxu0 %v1996
        %v2073 = vpop.f32.mrb[0].mxu0
        %v2074 = vadd.f32 %v1615, %v2073
        %v2075 = vpop.f32.mrb[0].mxu0
        %2076 = vdwg.mxu0
        %v2077 = vxor.u32 %v1724, 2147483648
        %v2078 = vxor.u32 %v1729, 2147483648
        %v2079 = vxor.u32 %v1839, 2147483648
        %v2080 = vxor.u32 %v1844, 2147483648
        %v2081 = vxor.u32 %v1954, 2147483648
        %v2082 = vxor.u32 %v1959, 2147483648
        %v2083 = vxor.u32 %v2069, 2147483648
        %v2084 = vxor.u32 %v2074, 2147483648
        %v2085 = vmul.f32 %v2077, 1.442695
        %v2086 = vpow.pop %v2085
        %v2087 = vmul.f32 %v2078, 1.442695
        %v2088 = vpow.pop %v2087
        %v2089 = vmul.f32 %v2079, 1.442695
        %v2090 = vpow.pop %v2089
        %v2091 = vmul.f32 %v2080, 1.442695
        %v2092 = vpow.pop %v2091
        %v2093 = vmul.f32 %v2081, 1.442695
        %v2094 = vpow.pop %v2093
        %v2095 = vmul.f32 %v2082, 1.442695
        %v2096 = vpow.pop %v2095
        %v2097 = vmul.f32 %v2083, 1.442695
        %v2098 = vpow.pop %v2097
        %v2099 = vmul.f32 %v2084, 1.442695
        %v2100 = vpow.pop %v2099
        %v2101 = vadd.f32 %v2086, 1.0
        %v2102 = vadd.f32 %v2088, 1.0
        %v2103 = vadd.f32 %v2090, 1.0
        %v2104 = vadd.f32 %v2092, 1.0
        %v2105 = vadd.f32 %v2094, 1.0
        %v2106 = vadd.f32 %v2096, 1.0
        %v2107 = vadd.f32 %v2098, 1.0
        %v2108 = vadd.f32 %v2100, 1.0
        %v2109 = vrcp.pop %v2101
        %v2110 = vmul.f32 1.0, %v2109
        %v2111 = vrcp.pop %v2102
        %v2112 = vmul.f32 1.0, %v2111
        %v2113 = vrcp.pop %v2103
        %v2114 = vmul.f32 1.0, %v2113
        %v2115 = vrcp.pop %v2104
        %v2116 = vmul.f32 1.0, %v2115
        %v2117 = vrcp.pop %v2105
        %v2118 = vmul.f32 1.0, %v2117
        %v2119 = vrcp.pop %v2106
        %v2120 = vmul.f32 1.0, %v2119
        %v2121 = vrcp.pop %v2107
        %v2122 = vmul.f32 1.0, %v2121
        %v2123 = vrcp.pop %v2108
        %v2124 = vmul.f32 1.0, %v2123
        %v2125 = vld [vmem:[%s5] sm:$0xff]
        %v2126 = vld [vmem:[%s5 + $0x8] sm:$0xff]
        %vm2127 = vcmask 130048
        %v2129 = vsel %vm2127, %v2125, 0
        %v2132 = vsel %vm2127, %v2126, 0
        %2134 = vmatprep.subr.mxu0 0.0
        %2135 = vmatpush1.msra.mxu0 %v2110
        %2136 = vmatprep.subr.mxu0 0.0
        %2137 = vmatpush1.msra.mxu0 %v2112
        %2138 = vmatprep.subr.mxu0 0.0
        %2139 = vmatpush1.msra.mxu0 0.0
        %2140 = vmatprep.subr.mxu0 0.0
        %2141 = vmatpush1.msra.mxu0 0.0
        %2142 = vmatprep.subr.mxu0 0.0
        %2143 = vmatpush1.msra.mxu0 0.0
        %2144 = vmatprep.subr.mxu0 0.0
        %2145 = vmatpush1.msra.mxu0 0.0
        %2146 = vmatprep.subr.mxu0 0.0
        %2147 = vmatpush1.msra.mxu0 0.0
        %2148 = vmatprep.subr.mxu0 0.0
        %2149 = vmatpush1.msra.mxu0 0.0
        %2150 = vmatprep.subr.mxu0 0.0
        %2151 = vmatpush1.msra.mxu0 0.0
        %2152 = vmatprep.subr.mxu0 0.0
        %2153 = vmatpush1.msra.mxu0 0.0
        %2154 = vmatprep.subr.mxu0 0.0
        %2155 = vmatpush1.msra.mxu0 0.0
        %2156 = vmatprep.subr.mxu0 0.0
        %2157 = vmatpush1.msra.mxu0 0.0
        %2158 = vmatprep.subr.mxu0 0.0
        %2159 = vmatpush1.msra.mxu0 0.0
        %2160 = vmatprep.subr.mxu0 0.0
        %2161 = vmatpush1.msra.mxu0 0.0
        %2162 = vmatprep.subr.mxu0 0.0
        %2163 = vmatpush1.msra.mxu0 0.0
        %2164 = vmatprep.subr.mxu0 0.0
        %2165 = vmatpush1.msra.mxu0 0.0
        %2166 = vmatprep.subr.mxu0 0.0
        %2167 = vmatpush1.msra.mxu0 0.0
        %2168 = vmatprep.subr.mxu0 0.0
        %2169 = vmatpush1.msra.mxu0 0.0
        %2170 = vmatprep.subr.mxu0 0.0
        %2171 = vmatpush1.msra.mxu0 0.0
        %2172 = vmatprep.subr.mxu0 0.0
        %2173 = vmatpush1.msra.mxu0 0.0
        %2174 = vmatprep.subr.mxu0 0.0
        %2175 = vmatpush1.msra.mxu0 0.0
        %2176 = vmatprep.subr.mxu0 0.0
        %2177 = vmatpush1.msra.mxu0 0.0
        %2178 = vmatprep.subr.mxu0 0.0
        %2179 = vmatpush1.msra.mxu0 0.0
        %2180 = vmatprep.subr.mxu0 0.0
        %2181 = vmatpush1.msra.mxu0 0.0
        %2182 = vmatprep.subr.mxu0 0.0
        %2183 = vmatpush1.msra.mxu0 0.0
        %2184 = vmatprep.subr.mxu0 0.0
        %2185 = vmatpush1.msra.mxu0 0.0
        %2186 = vmatprep.subr.mxu0 0.0
        %2187 = vmatpush1.msra.mxu0 0.0
        %2188 = vmatprep.subr.mxu0 0.0
        %2189 = vmatpush1.msra.mxu0 0.0
        %2190 = vmatprep.subr.mxu0 0.0
        %2191 = vmatpush1.msra.mxu0 0.0
        %2192 = vmatprep.subr.mxu0 0.0
        %2193 = vmatpush1.msra.mxu0 0.0
        %2194 = vmatprep.subr.mxu0 0.0
        %2195 = vmatpush1.msra.mxu0 0.0
        %2196 = vmatprep.subr.mxu0 0.0
        %2197 = vmatpush1.msra.mxu0 0.0
        %2198 = vmatprep.mubr.f32.mxu0 0.0
        %2199 = vmatmul.mubr.f32.gmra.mrb[0].mxu0 %v2129
        %v2200 = vpop.f32.mrb[0].mxu0
        %v2201 = vadd.f32 0.0, %v2200
        %v2202 = vpop.f32.mrb[0].mxu0
        %2203 = vmatprep.mubr.f32.mxu0 0.0
        %2204 = vmatmul.mubr.f32.gmra.mrb[0].mxu0 %v2132
        %v2205 = vpop.f32.mrb[0].mxu0
        %v2206 = vadd.f32 0.0, %v2205
        %v2207 = vpop.f32.mrb[0].mxu0
        %2208 = vdwg.mxu0
        %2209 = vmatprep.subr.mxu0 0.0
        %2210 = vmatpush1.msra.mxu0 %v2114
        %2211 = vmatprep.subr.mxu0 0.0
        %2212 = vmatpush1.msra.mxu0 %v2116
        %2213 = vmatprep.subr.mxu0 0.0
        %2214 = vmatpush1.msra.mxu0 0.0
        %2215 = vmatprep.subr.mxu0 0.0
        %2216 = vmatpush1.msra.mxu0 0.0
        %2217 = vmatprep.subr.mxu0 0.0
        %2218 = vmatpush1.msra.mxu0 0.0
        %2219 = vmatprep.subr.mxu0 0.0
        %2220 = vmatpush1.msra.mxu0 0.0
        %2221 = vmatprep.subr.mxu0 0.0
        %2222 = vmatpush1.msra.mxu0 0.0
        %2223 = vmatprep.subr.mxu0 0.0
        %2224 = vmatpush1.msra.mxu0 0.0
        %2225 = vmatprep.subr.mxu0 0.0
        %2226 = vmatpush1.msra.mxu0 0.0
        %2227 = vmatprep.subr.mxu0 0.0
        %2228 = vmatpush1.msra.mxu0 0.0
        %2229 = vmatprep.subr.mxu0 0.0
        %2230 = vmatpush1.msra.mxu0 0.0
        %2231 = vmatprep.subr.mxu0 0.0
        %2232 = vmatpush1.msra.mxu0 0.0
        %2233 = vmatprep.subr.mxu0 0.0
        %2234 = vmatpush1.msra.mxu0 0.0
        %2235 = vmatprep.subr.mxu0 0.0
        %2236 = vmatpush1.msra.mxu0 0.0
        %2237 = vmatprep.subr.mxu0 0.0
        %2238 = vmatpush1.msra.mxu0 0.0
        %2239 = vmatprep.subr.mxu0 0.0
        %2240 = vmatpush1.msra.mxu0 0.0
        %2241 = vmatprep.subr.mxu0 0.0
        %2242 = vmatpush1.msra.mxu0 0.0
        %2243 = vmatprep.subr.mxu0 0.0
        %2244 = vmatpush1.msra.mxu0 0.0
        %2245 = vmatprep.subr.mxu0 0.0
        %2246 = vmatpush1.msra.mxu0 0.0
        %2247 = vmatprep.subr.mxu0 0.0
        %2248 = vmatpush1.msra.mxu0 0.0
        %2249 = vmatprep.subr.mxu0 0.0
        %2250 = vmatpush1.msra.mxu0 0.0
        %2251 = vmatprep.subr.mxu0 0.0
        %2252 = vmatpush1.msra.mxu0 0.0
        %2253 = vmatprep.subr.mxu0 0.0
        %2254 = vmatpush1.msra.mxu0 0.0
        %2255 = vmatprep.subr.mxu0 0.0
        %2256 = vmatpush1.msra.mxu0 0.0
        %2257 = vmatprep.subr.mxu0 0.0
        %2258 = vmatpush1.msra.mxu0 0.0
        %2259 = vmatprep.subr.mxu0 0.0
        %2260 = vmatpush1.msra.mxu0 0.0
        %2261 = vmatprep.subr.mxu0 0.0
        %2262 = vmatpush1.msra.mxu0 0.0
        %2263 = vmatprep.subr.mxu0 0.0
        %2264 = vmatpush1.msra.mxu0 0.0
        %2265 = vmatprep.subr.mxu0 0.0
        %2266 = vmatpush1.msra.mxu0 0.0
        %2267 = vmatprep.subr.mxu0 0.0
        %2268 = vmatpush1.msra.mxu0 0.0
        %2269 = vmatprep.subr.mxu0 0.0
        %2270 = vmatpush1.msra.mxu0 0.0
        %2271 = vmatprep.subr.mxu0 0.0
        %2272 = vmatpush1.msra.mxu0 0.0
        %2273 = vmatprep.mubr.f32.mxu0 0.0
        %2274 = vmatmul.mubr.f32.gmra.mrb[0].mxu0 %v2129
        %v2275 = vpop.f32.mrb[0].mxu0
        %v2276 = vadd.f32 0.0, %v2275
        %v2277 = vpop.f32.mrb[0].mxu0
        %2278 = vmatprep.mubr.f32.mxu0 0.0
        %2279 = vmatmul.mubr.f32.gmra.mrb[0].mxu0 %v2132
        %v2280 = vpop.f32.mrb[0].mxu0
        %v2281 = vadd.f32 0.0, %v2280
        %v2282 = vpop.f32.mrb[0].mxu0
        %2283 = vdwg.mxu0
        %2284 = vmatprep.subr.mxu0 0.0
        %2285 = vmatpush1.msra.mxu0 %v2118
        %2286 = vmatprep.subr.mxu0 0.0
        %2287 = vmatpush1.msra.mxu0 %v2120
        %2288 = vmatprep.subr.mxu0 0.0
        %2289 = vmatpush1.msra.mxu0 0.0
        %2290 = vmatprep.subr.mxu0 0.0
        %2291 = vmatpush1.msra.mxu0 0.0
        %2292 = vmatprep.subr.mxu0 0.0
        %2293 = vmatpush1.msra.mxu0 0.0
        %2294 = vmatprep.subr.mxu0 0.0
        %2295 = vmatpush1.msra.mxu0 0.0
        %2296 = vmatprep.subr.mxu0 0.0
        %2297 = vmatpush1.msra.mxu0 0.0
        %2298 = vmatprep.subr.mxu0 0.0
        %2299 = vmatpush1.msra.mxu0 0.0
        %2300 = vmatprep.subr.mxu0 0.0
        %2301 = vmatpush1.msra.mxu0 0.0
        %2302 = vmatprep.subr.mxu0 0.0
        %2303 = vmatpush1.msra.mxu0 0.0
        %2304 = vmatprep.subr.mxu0 0.0
        %2305 = vmatpush1.msra.mxu0 0.0
        %2306 = vmatprep.subr.mxu0 0.0
        %2307 = vmatpush1.msra.mxu0 0.0
        %2308 = vmatprep.subr.mxu0 0.0
        %2309 = vmatpush1.msra.mxu0 0.0
        %2310 = vmatprep.subr.mxu0 0.0
        %2311 = vmatpush1.msra.mxu0 0.0
        %2312 = vmatprep.subr.mxu0 0.0
        %2313 = vmatpush1.msra.mxu0 0.0
        %2314 = vmatprep.subr.mxu0 0.0
        %2315 = vmatpush1.msra.mxu0 0.0
        %2316 = vmatprep.subr.mxu0 0.0
        %2317 = vmatpush1.msra.mxu0 0.0
        %2318 = vmatprep.subr.mxu0 0.0
        %2319 = vmatpush1.msra.mxu0 0.0
        %2320 = vmatprep.subr.mxu0 0.0
        %2321 = vmatpush1.msra.mxu0 0.0
        %2322 = vmatprep.subr.mxu0 0.0
        %2323 = vmatpush1.msra.mxu0 0.0
        %2324 = vmatprep.subr.mxu0 0.0
        %2325 = vmatpush1.msra.mxu0 0.0
        %2326 = vmatprep.subr.mxu0 0.0
        %2327 = vmatpush1.msra.mxu0 0.0
        %2328 = vmatprep.subr.mxu0 0.0
        %2329 = vmatpush1.msra.mxu0 0.0
        %2330 = vmatprep.subr.mxu0 0.0
        %2331 = vmatpush1.msra.mxu0 0.0
        %2332 = vmatprep.subr.mxu0 0.0
        %2333 = vmatpush1.msra.mxu0 0.0
        %2334 = vmatprep.subr.mxu0 0.0
        %2335 = vmatpush1.msra.mxu0 0.0
        %2336 = vmatprep.subr.mxu0 0.0
        %2337 = vmatpush1.msra.mxu0 0.0
        %2338 = vmatprep.subr.mxu0 0.0
        %2339 = vmatpush1.msra.mxu0 0.0
        %2340 = vmatprep.subr.mxu0 0.0
        %2341 = vmatpush1.msra.mxu0 0.0
        %2342 = vmatprep.subr.mxu0 0.0
        %2343 = vmatpush1.msra.mxu0 0.0
        %2344 = vmatprep.subr.mxu0 0.0
        %2345 = vmatpush1.msra.mxu0 0.0
        %2346 = vmatprep.subr.mxu0 0.0
        %2347 = vmatpush1.msra.mxu0 0.0
        %2348 = vmatprep.mubr.f32.mxu0 0.0
        %2349 = vmatmul.mubr.f32.gmra.mrb[0].mxu0 %v2129
        %v2350 = vpop.f32.mrb[0].mxu0
        %v2351 = vadd.f32 0.0, %v2350
        %v2352 = vpop.f32.mrb[0].mxu0
        %2353 = vmatprep.mubr.f32.mxu0 0.0
        %2354 = vmatmul.mubr.f32.gmra.mrb[0].mxu0 %v2132
        %v2355 = vpop.f32.mrb[0].mxu0
        %v2356 = vadd.f32 0.0, %v2355
        %v2357 = vpop.f32.mrb[0].mxu0
        %2358 = vdwg.mxu0
        %2359 = vmatprep.subr.mxu0 0.0
        %2360 = vmatpush1.msra.mxu0 %v2122
        %2361 = vmatprep.subr.mxu0 0.0
        %2362 = vmatpush1.msra.mxu0 %v2124
        %2363 = vmatprep.subr.mxu0 0.0
        %2364 = vmatpush1.msra.mxu0 0.0
        %2365 = vmatprep.subr.mxu0 0.0
        %2366 = vmatpush1.msra.mxu0 0.0
        %2367 = vmatprep.subr.mxu0 0.0
        %2368 = vmatpush1.msra.mxu0 0.0
        %2369 = vmatprep.subr.mxu0 0.0
        %2370 = vmatpush1.msra.mxu0 0.0
        %2371 = vmatprep.subr.mxu0 0.0
        %2372 = vmatpush1.msra.mxu0 0.0
        %2373 = vmatprep.subr.mxu0 0.0
        %2374 = vmatpush1.msra.mxu0 0.0
        %2375 = vmatprep.subr.mxu0 0.0
        %2376 = vmatpush1.msra.mxu0 0.0
        %2377 = vmatprep.subr.mxu0 0.0
        %2378 = vmatpush1.msra.mxu0 0.0
        %2379 = vmatprep.subr.mxu0 0.0
        %2380 = vmatpush1.msra.mxu0 0.0
        %2381 = vmatprep.subr.mxu0 0.0
        %2382 = vmatpush1.msra.mxu0 0.0
        %2383 = vmatprep.subr.mxu0 0.0
        %2384 = vmatpush1.msra.mxu0 0.0
        %2385 = vmatprep.subr.mxu0 0.0
        %2386 = vmatpush1.msra.mxu0 0.0
        %2387 = vmatprep.subr.mxu0 0.0
        %2388 = vmatpush1.msra.mxu0 0.0
        %2389 = vmatprep.subr.mxu0 0.0
        %2390 = vmatpush1.msra.mxu0 0.0
        %2391 = vmatprep.subr.mxu0 0.0
        %2392 = vmatpush1.msra.mxu0 0.0
        %2393 = vmatprep.subr.mxu0 0.0
        %2394 = vmatpush1.msra.mxu0 0.0
        %2395 = vmatprep.subr.mxu0 0.0
        %2396 = vmatpush1.msra.mxu0 0.0
        %2397 = vmatprep.subr.mxu0 0.0
        %2398 = vmatpush1.msra.mxu0 0.0
        %2399 = vmatprep.subr.mxu0 0.0
        %2400 = vmatpush1.msra.mxu0 0.0
        %2401 = vmatprep.subr.mxu0 0.0
        %2402 = vmatpush1.msra.mxu0 0.0
        %2403 = vmatprep.subr.mxu0 0.0
        %2404 = vmatpush1.msra.mxu0 0.0
        %2405 = vmatprep.subr.mxu0 0.0
        %2406 = vmatpush1.msra.mxu0 0.0
        %2407 = vmatprep.subr.mxu0 0.0
        %2408 = vmatpush1.msra.mxu0 0.0
        %2409 = vmatprep.subr.mxu0 0.0
        %2410 = vmatpush1.msra.mxu0 0.0
        %2411 = vmatprep.subr.mxu0 0.0
        %2412 = vmatpush1.msra.mxu0 0.0
        %2413 = vmatprep.subr.mxu0 0.0
        %2414 = vmatpush1.msra.mxu0 0.0
        %2415 = vmatprep.subr.mxu0 0.0
        %2416 = vmatpush1.msra.mxu0 0.0
        %2417 = vmatprep.subr.mxu0 0.0
        %2418 = vmatpush1.msra.mxu0 0.0
        %2419 = vmatprep.subr.mxu0 0.0
        %2420 = vmatpush1.msra.mxu0 0.0
        %2421 = vmatprep.subr.mxu0 0.0
        %2422 = vmatpush1.msra.mxu0 0.0
        %2423 = vmatprep.mubr.f32.mxu0 0.0
        %2424 = vmatmul.mubr.f32.gmra.mrb[0].mxu0 %v2129
        %v2425 = vpop.f32.mrb[0].mxu0
        %v2426 = vadd.f32 0.0, %v2425
        %v2427 = vpop.f32.mrb[0].mxu0
        %2428 = vmatprep.mubr.f32.mxu0 0.0
        %2429 = vmatmul.mubr.f32.gmra.mrb[0].mxu0 %v2132
        %v2430 = vpop.f32.mrb[0].mxu0
        %v2431 = vadd.f32 0.0, %v2430
        %v2432 = vpop.f32.mrb[0].mxu0
        %2433 = vdwg.mxu0
        %v2434 = vsel %vm2127, %v2201, -inf
        %v2435 = vsel %vm2127, %v2206, -inf
        %v2436 = vmax.f32 %v2434, %v2435
        %v2437 = vrot.slane %v2436, 4
        %v2438 = vmax.f32 %v2436, %v2437
        %v2439 = vrot.slane %v2438, 2
        %v2440 = vmax.f32 %v2438, %v2439
        %v2441 = vrot.slane %v2440, 1
        %v2442 = vmax.f32 %v2440, %v2441
        %v2443 = vsel %vm2127, %v2276, -inf
        %v2444 = vsel %vm2127, %v2281, -inf
        %v2445 = vmax.f32 %v2443, %v2444
        %v2446 = vrot.slane %v2445, 4
        %v2447 = vmax.f32 %v2445, %v2446
        %v2448 = vrot.slane %v2447, 2
        %v2449 = vmax.f32 %v2447, %v2448
        %v2450 = vrot.slane %v2449, 1
        %v2451 = vmax.f32 %v2449, %v2450
        %v2452 = vsel %vm2127, %v2351, -inf
        %v2453 = vsel %vm2127, %v2356, -inf
        %v2454 = vmax.f32 %v2452, %v2453
        %v2455 = vrot.slane %v2454, 4
        %v2456 = vmax.f32 %v2454, %v2455
        %v2457 = vrot.slane %v2456, 2
        %v2458 = vmax.f32 %v2456, %v2457
        %v2459 = vrot.slane %v2458, 1
        %v2460 = vmax.f32 %v2458, %v2459
        %v2461 = vsel %vm2127, %v2426, -inf
        %v2462 = vsel %vm2127, %v2431, -inf
        %v2463 = vmax.f32 %v2461, %v2462
        %v2464 = vrot.slane %v2463, 4
        %v2465 = vmax.f32 %v2463, %v2464
        %v2466 = vrot.slane %v2465, 2
        %v2467 = vmax.f32 %v2465, %v2466
        %v2468 = vrot.slane %v2467, 1
        %v2469 = vmax.f32 %v2467, %v2468
        %v2470 = vsub.f32 %v2201, %v2442
        %v2471 = vsub.f32 %v2206, %v2442
        %v2472 = vsub.f32 %v2276, %v2451
        %v2473 = vsub.f32 %v2281, %v2451
        %v2474 = vsub.f32 %v2351, %v2460
        %v2475 = vsub.f32 %v2356, %v2460
        %v2476 = vsub.f32 %v2426, %v2469
        %v2477 = vsub.f32 %v2431, %v2469
        %v2478 = vmul.f32 %v2470, 1.442695
        %v2479 = vpow.pop %v2478
        %v2480 = vmul.f32 %v2471, 1.442695
        %v2481 = vpow.pop %v2480
        %v2482 = vmul.f32 %v2472, 1.442695
        %v2483 = vpow.pop %v2482
        %v2484 = vmul.f32 %v2473, 1.442695
        %v2485 = vpow.pop %v2484
        %v2486 = vmul.f32 %v2474, 1.442695
        %v2487 = vpow.pop %v2486
        %v2488 = vmul.f32 %v2475, 1.442695
        %v2489 = vpow.pop %v2488
        %v2490 = vmul.f32 %v2476, 1.442695
        %v2491 = vpow.pop %v2490
        %v2492 = vmul.f32 %v2477, 1.442695
        %v2493 = vpow.pop %v2492
        %v2494 = vsel %vm2127, %v2479, 0.0
        %v2495 = vsel %vm2127, %v2481, 0.0
        %v2496 = vadd.f32 %v2494, %v2495
        %v2497 = vrot.slane %v2496, 4
        %v2498 = vadd.f32 %v2496, %v2497
        %v2499 = vrot.slane %v2498, 2
        %v2500 = vadd.f32 %v2498, %v2499
        %v2501 = vrot.slane %v2500, 1
        %v2502 = vadd.f32 %v2500, %v2501
        %v2503 = vsel %vm2127, %v2483, 0.0
        %v2504 = vsel %vm2127, %v2485, 0.0
        %v2505 = vadd.f32 %v2503, %v2504
        %v2506 = vrot.slane %v2505, 4
        %v2507 = vadd.f32 %v2505, %v2506
        %v2508 = vrot.slane %v2507, 2
        %v2509 = vadd.f32 %v2507, %v2508
        %v2510 = vrot.slane %v2509, 1
        %v2511 = vadd.f32 %v2509, %v2510
        %v2512 = vsel %vm2127, %v2487, 0.0
        %v2513 = vsel %vm2127, %v2489, 0.0
        %v2514 = vadd.f32 %v2512, %v2513
        %v2515 = vrot.slane %v2514, 4
        %v2516 = vadd.f32 %v2514, %v2515
        %v2517 = vrot.slane %v2516, 2
        %v2518 = vadd.f32 %v2516, %v2517
        %v2519 = vrot.slane %v2518, 1
        %v2520 = vadd.f32 %v2518, %v2519
        %v2521 = vsel %vm2127, %v2491, 0.0
        %v2522 = vsel %vm2127, %v2493, 0.0
        %v2523 = vadd.f32 %v2521, %v2522
        %v2524 = vrot.slane %v2523, 4
        %v2525 = vadd.f32 %v2523, %v2524
        %v2526 = vrot.slane %v2525, 2
        %v2527 = vadd.f32 %v2525, %v2526
        %v2528 = vrot.slane %v2527, 1
        %v2529 = vadd.f32 %v2527, %v2528
        %v2530 = vrcp.pop %v2502
        %v2531 = vmul.f32 %v2479, %v2530
        %v2532 = vmul.f32 %v2481, %v2530
        %v2533 = vrcp.pop %v2511
        %v2534 = vmul.f32 %v2483, %v2533
        %v2535 = vmul.f32 %v2485, %v2533
        %v2536 = vrcp.pop %v2520
        %v2537 = vmul.f32 %v2487, %v2536
        %v2538 = vmul.f32 %v2489, %v2536
        %v2539 = vrcp.pop %v2529
        %v2540 = vmul.f32 %v2491, %v2539
        %v2541 = vmul.f32 %v2493, %v2539
        %2542 = vst.msk [vmem:[%s247] sm:$0xff] %vm2127, %v2531
        %2543 = vst.msk [vmem:[%s247 + $0x8] sm:$0xff] %vm2127, %v2532
        %2544 = vst.msk [vmem:[%s247 + $0x10] sm:$0xff] %vm2127, %v2534
        %2545 = vst.msk [vmem:[%s247 + $0x18] sm:$0xff] %vm2127, %v2535
        %2546 = vst.msk [vmem:[%s247 + $0x20] sm:$0xff] %vm2127, %v2537
        %2547 = vst.msk [vmem:[%s247 + $0x28] sm:$0xff] %vm2127, %v2538
        %2548 = vst.msk [vmem:[%s247 + $0x30] sm:$0xff] %vm2127, %v2540
        %2549 = vst.msk [vmem:[%s247 + $0x38] sm:$0xff] %vm2127, %v2541
        %s2550 = sand.u32 %s159, 1
        %s2551 = scalar_lea.sflag [#allocation3], %s2550
        %s2552 = sand.u32 %s159, 1
        %s2553 = smul.addr %s2552, 64
        %s2554 = scalar_lea.vmem [#allocation2], %s2553
        // Predicated region
        $region45: #{tpu_custom_call.1} parent=43 // pred_check
          %p2555 = pneg %p169
        $region46: #{tpu_custom_call.1} parent=43 // pred_check_branch
          %2557 = sbr.rel (%p2555) target = $region48
        $region47: #{tpu_custom_call.1} parent=43 // pred_region
          %s2558 = smul.u32 4, %s20
          %s2560 = ssub.s32 1024, 1024
          %2561 = vsyncadd %s2551, %s2560
          %s2562 = smul.addr %s2558, 2
          %s2563 = smul.addr %s2562, 128
          %s2564 = scalar_lea.hbm %s6, %s2563
          %s2565 = sshll.u32 %s2554, 4
          %s2566 = int_to_ptr.vmem [resolvable:$true] %s2565
          %2571 = dma.vmem_to_hbm [thread:$0]  %s2566, 1024, %s2564, %s2551, 128, 128, 8
        $region48: #{tpu_custom_call.1} parent=43 // pred_fallthru
          _
      $region44: #{tpu_custom_call.1} parent=5 // pred_fallthru
        _
      %p2572 = scmp.le.s32.totalorder 2, %s15
      // Predicated region
      $region49: #{tpu_custom_call.1} parent=5 // pred_check
        %p2573 = pneg %p2572
      $region50: #{tpu_custom_call.1} parent=5 // pred_check_branch
        %2575 = sbr.rel (%p2573) target = $region52
      $region51: #{tpu_custom_call.1} parent=5 // pred_region
        %s2576 = ssub.s32 %s15, 2
        // Predicated region
        $region53: #{tpu_custom_call.1} parent=51 // pred_check
          %p2577 = pneg %p175
        $region54: #{tpu_custom_call.1} parent=51 // pred_check_branch
          %2579 = sbr.rel (%p2577) target = $region56
        $region55: #{tpu_custom_call.1} parent=51 // pred_region
          %s2580 = sand.u32 %s160, 1
          %s2581 = scalar_lea.sflag [#allocation3], %s2580
          %s2582 = sand.u32 %s160, 1
          %s2583 = smul.addr %s2582, 64
          %s2584 = scalar_lea.vmem [#allocation2], %s2583
          %2585 = dma.done %s2581, 1024
        $region56: #{tpu_custom_call.1} parent=51 // pred_fallthru
          _
      $region52: #{tpu_custom_call.1} parent=5 // pred_fallthru
        _
    $region6: #{tpu_custom_call.1} parent=1 // loop_footer
      %s19 = sadd.s32 1, %s15
    $region7: #{tpu_custom_call.1} parent=1 // loop_footer_branch
      %14 = sbr.rel target = $region3
    $region8: #{tpu_custom_call.1} parent=1 // loop_exit
      _
    %2586 = vsyncpa [#allocation3], 1
    %s2587 = scalar_lea.sflag [#allocation3], 1
    %2588 = vsyncpa %s2587, 1

</llo_original>
